<compile_context>
chip_gen: v7x
topology: tpu7x:2x2x1
jax: 0.10.0
libtpu: 0.0.40
codegen_flags: <defaults>
</compile_context>

<pallas_src>
import math

import jax
import jax.numpy as jnp
import numpy as np
from jax.experimental import pallas as pl
from jax.experimental.pallas import tpu as pltpu


def _layer_norm(v, w, b, eps=1e-5):
    mu = jnp.mean(v, axis=-1, keepdims=True)
    c = v - mu
    var = jnp.mean(c * c, axis=-1, keepdims=True)
    return c * jax.lax.rsqrt(var + eps) * w + b


def make_encoder_kernel(embed_dim, nhead, seq, batch_tile, *, resident, compute_dtype):
    E = embed_dim
    H = nhead
    Dh = E // H
    scale = 1.0 / math.sqrt(Dh)
    S = seq
    TB = batch_tile
    M = TB * S
    cdt = compute_dtype

    def kernel(x_ref, mask_ref, pos_ref,
               wqkv_ref, wo_ref, w1_ref, w2_ref,
               vec_ref, fn_ref,
               o_ref, xs):
        l = pl.program_id(1)
        # Resident weights: dynamic index into the full (L, ...) slab kept in VMEM.
        # Per-layer blocks: BlockSpec already delivered layer l, so index 0.
        idx = l if resident else 0

        # First layer of this batch block: load x + positional encoding into scratch.
        @pl.when(l == 0)
        def _():
            xs[...] = x_ref[...] + pos_ref[...][None]

        x = xs[...]             # (TB, S, E) residual stream (f32)
        mask = mask_ref[...]    # (TB, 1, S) additive key-padding mask

        # Packed per-layer LayerNorm scales / biases (one slab -> one DMA descriptor).
        vecs = vec_ref[idx]     # (8, 3E)
        ln1w, ln1b = vecs[0, :E], vecs[1, :E]
        ln2w, ln2b = vecs[2, :E], vecs[3, :E]
        bo, b2 = vecs[4, :E], vecs[5, :E]
        bqkv = vecs[6, :]
        b1 = vecs[7, :2 * E]

        wqkv = wqkv_ref[idx]    # (E, 3E)  pre-transposed host-side
        wo = wo_ref[idx]        # (E, E)
        w1 = w1_ref[idx]        # (E, 2E)
        w2 = w2_ref[idx]        # (2E, E)

        # ---- self-attention block (norm_first) ----
        xn = _layer_norm(x, ln1w, ln1b)
        qkv = jnp.dot(xn.reshape(M, E).astype(cdt), wqkv,
                      preferred_element_type=jnp.float32) + bqkv          # (M, 3E) f32
        q3 = qkv[:, :E].reshape(TB, S, E)
        k3 = qkv[:, E:2 * E].reshape(TB, S, E)
        v3 = qkv[:, 2 * E:].reshape(TB, S, E)

        # Split heads via lane slices, stack heads into the *leading* batch axis
        # (only layout-safe ops), giving (H*TB, S, Dh) for batched attention.
        qh = jnp.concatenate([q3[:, :, h * Dh:(h + 1) * Dh] for h in range(H)],
                             axis=0).astype(cdt)
        kh = jnp.concatenate([k3[:, :, h * Dh:(h + 1) * Dh] for h in range(H)],
                             axis=0).astype(cdt)
        vh = jnp.concatenate([v3[:, :, h * Dh:(h + 1) * Dh] for h in range(H)],
                             axis=0).astype(cdt)

        # One scores matmul, one mask add, one softmax, one value matmul for ALL heads.
        s = jnp.einsum('bqd,bkd->bqk', qh, kh,
                       preferred_element_type=jnp.float32) * scale        # (H*TB, S, S)
        s = s.reshape(H, TB, S, S) + mask[None]                           # broadcast mask once
        s = s - jnp.max(s, axis=-1, keepdims=True)
        p = jnp.exp(s)
        p = p * pl.reciprocal(jnp.sum(p, axis=-1, keepdims=True), approx=False)
        p = p.reshape(H * TB, S, S).astype(cdt)
        ah = jnp.einsum('bqk,bkd->bqd', p, vh,
                        preferred_element_type=jnp.float32)               # (H*TB, S, Dh)

        # Re-assemble heads along the lane axis and do a single full-K output projection.
        a4 = ah.reshape(H, TB, S, Dh)
        att = jnp.concatenate([a4[h] for h in range(H)], axis=-1).reshape(M, E)
        x = x + (jnp.dot(att.astype(cdt), wo,
                         preferred_element_type=jnp.float32) + bo).reshape(TB, S, E)

        # ---- feed-forward block (norm_first), relu activation ----
        xn2 = _layer_norm(x, ln2w, ln2b)
        h1 = jnp.maximum(
            jnp.dot(xn2.reshape(M, E).astype(cdt), w1,
                    preferred_element_type=jnp.float32) + b1, 0.0)
        ff = jnp.dot(h1.astype(cdt), w2, preferred_element_type=jnp.float32) + b2
        x = x + ff.reshape(TB, S, E)
        xs[...] = x

        # Last layer: apply output LayerNorm and store.
        @pl.when(l == pl.num_programs(1) - 1)
        def _():
            o_ref[...] = _layer_norm(x, fn_ref[0, :], fn_ref[1, :]).astype(o_ref.dtype)

    return kernel


def _pick_batch_tile(B, S, target_rows=512):
    """Largest divisor of B with TB*S <= target_rows; prefer >=2 batch tiles so the
    parallel batch grid axis can be split across TensorCores when it costs little."""
    tb = 1
    for d in range(1, B + 1):
        if B % d == 0 and d * S <= target_rows:
            tb = d
    if tb == B and B > 1:
        half = max(d for d in range(1, B) if B % d == 0)
        if half * S >= min(128, (B * S) // 2):
            tb = half
    return tb


def _vmem_capacity_bytes():
    """Physical VMEM per TensorCore; conservative fallback = v7x's 64 MiB."""
    try:
        info = pltpu.get_tpu_info()
        cap = getattr(info, "vmem_capacity_bytes", None)
        if cap:
            return int(cap)
    except Exception:
        pass
    return 64 * 2 ** 20


def inter_sensor_transformer(x, key_padding_mask, params, *, nhead,
                             compute_dtype=jnp.float32):
    """x: (B, S, E) float32; key_padding_mask: (B, S) bool, True = pad (ignored key).

    compute_dtype: dtype for MXU operands (weights + matmul inputs). Use jnp.bfloat16 on
    v6e/v7x for ~2x MXU throughput and half the weight VMEM; accumulation, residual
    stream, LayerNorm and softmax stay float32.
    """
    B, S, E = x.shape
    L = params["wqkv"].shape[0]
    TB = _pick_batch_tile(B, S)
    nb = B // TB

    mask_add = jnp.where(key_padding_mask, -1e9, 0.0).astype(jnp.float32).reshape(B, 1, S)
    pos = params["pos"][:S]

    # Host-side pre-transpose (and optional bf16 cast) so no in-kernel .T is needed.
    wqkv_t = jnp.swapaxes(params["wqkv"], 1, 2).astype(compute_dtype)   # (L, E, 3E)
    wo_t = jnp.swapaxes(params["wo"], 1, 2).astype(compute_dtype)       # (L, E, E)
    w1_t = jnp.swapaxes(params["w1"], 1, 2).astype(compute_dtype)       # (L, E, 2E)
    w2_t = jnp.swapaxes(params["w2"], 1, 2).astype(compute_dtype)       # (L, 2E, E)

    # Pack the many tiny per-layer LN / bias vectors into one slab -> one DMA descriptor.
    vec = jnp.zeros((L, 8, 3 * E), jnp.float32)
    vec = vec.at[:, 0, :E].set(params["ln1w"][:, 0])
    vec = vec.at[:, 1, :E].set(params["ln1b"][:, 0])
    vec = vec.at[:, 2, :E].set(params["ln2w"][:, 0])
    vec = vec.at[:, 3, :E].set(params["ln2b"][:, 0])
    vec = vec.at[:, 4, :E].set(params["bo"][:, 0])
    vec = vec.at[:, 5, :E].set(params["b2"][:, 0])
    vec = vec.at[:, 6, :].set(params["bqkv"][:, 0])
    vec = vec.at[:, 7, :2 * E].set(params["b1"][:, 0])

    fn = jnp.stack([params["fnw"][0], params["fnb"][0]], axis=0)  # (2, E)

    # --- VMEM accounting (actual buffer sizes, double-buffered) and residency choice ---
    w_itm = jnp.dtype(compute_dtype).itemsize
    per_layer_w = (E * 3 * E + E * E + E * 2 * E + 2 * E * E) * w_itm + 8 * 3 * E * 4
    io_bytes = (TB * S * E + TB * S + S * E + 2 * E) * 4 + TB * S * E * 4  # ins + out
    scratch_bytes = TB * S * E * 4
    vmem_cap = _vmem_capacity_bytes()
    # Keep all L layers' weights resident only if they fit comfortably (important on
    # v7x's 64 MiB per-TC VMEM); otherwise stream per-layer blocks (auto-prefetched).
    resident = (2 * L * per_layer_w + 2 * io_bytes + scratch_bytes) <= int(0.5 * vmem_cap)
    w_window = L * per_layer_w if resident else per_layer_w
    need = 2 * (w_window + io_bytes) + scratch_bytes
    vmem_limit = int(min(int(0.92 * vmem_cap),
                         max(32 * 2 ** 20, int(1.5 * need) + (4 << 20))))

    if resident:
        wmap = lambda b, l: (0, 0, 0)                                   # stays in VMEM
        wqkv_spec = pl.BlockSpec((L, E, 3 * E), wmap)
        wo_spec = pl.BlockSpec((L, E, E), wmap)
        w1_spec = pl.BlockSpec((L, E, 2 * E), wmap)
        w2_spec = pl.BlockSpec((L, 2 * E, E), wmap)
        vec_spec = pl.BlockSpec((L, 8, 3 * E), wmap)
    else:
        wmap = lambda b, l: (l, 0, 0)                                   # per-layer stream
        wqkv_spec = pl.BlockSpec((1, E, 3 * E), wmap)
        wo_spec = pl.BlockSpec((1, E, E), wmap)
        w1_spec = pl.BlockSpec((1, E, 2 * E), wmap)
        w2_spec = pl.BlockSpec((1, 2 * E, E), wmap)
        vec_spec = pl.BlockSpec((1, 8, 3 * E), wmap)

    kernel = make_encoder_kernel(E, nhead, S, TB, resident=resident,
                                 compute_dtype=compute_dtype)

    in_specs = [
        pl.BlockSpec((TB, S, E), lambda b, l: (b, 0, 0)),   # x
        pl.BlockSpec((TB, 1, S), lambda b, l: (b, 0, 0)),   # additive key-padding mask
        pl.BlockSpec((S, E), lambda b, l: (0, 0)),          # positional encoding
        wqkv_spec, wo_spec, w1_spec, w2_spec, vec_spec,
        pl.BlockSpec((2, E), lambda b, l: (0, 0)),          # output_norm weight/bias
    ]

    return pl.pallas_call(
        kernel,
        out_shape=jax.ShapeDtypeStruct((B, S, E), x.dtype),
        grid=(nb, L),
        in_specs=in_specs,
        out_specs=pl.BlockSpec((TB, S, E), lambda b, l: (b, 0, 0)),
        scratch_shapes=[pltpu.VMEM((TB, S, E), jnp.float32)],
        compiler_params=pltpu.CompilerParams(
            # batch axis parallel (layer axis carries the residual stream -> arbitrary);
            # on v7x, CORE_PARALLEL on the batch axis is a further option.
            dimension_semantics=("parallel", "arbitrary"),
            vmem_limit_bytes=vmem_limit),
    )(x, mask_add, pos, wqkv_t, wo_t, w1_t, w2_t, vec, fn)


def init_params(key, embed_dim, nhead, num_layers, max_sensors):
    E, L = embed_dim, num_layers
    ks = jax.random.split(key, 9)
    nrm = lambda k, shape, s=0.05: (s * jax.random.normal(k, shape)).astype(jnp.float32)
    return dict(
        # PyTorch inits pos to zeros; use small random values so the path is exercised.
        pos=nrm(ks[0], (max_sensors, E)),
        ln1w=jnp.ones((L, 1, E), jnp.float32),
        ln1b=jnp.zeros((L, 1, E), jnp.float32),
        ln2w=jnp.ones((L, 1, E), jnp.float32),
        ln2b=jnp.zeros((L, 1, E), jnp.float32),
        wqkv=nrm(ks[1], (L, 3 * E, E)),
        bqkv=nrm(ks[2], (L, 1, 3 * E)),
        wo=nrm(ks[3], (L, E, E)),
        bo=nrm(ks[4], (L, 1, E)),
        w1=nrm(ks[5], (L, 2 * E, E)),
        b1=nrm(ks[6], (L, 1, 2 * E)),
        w2=nrm(ks[7], (L, E, 2 * E)),
        b2=nrm(ks[8], (L, 1, E)),
        fnw=jnp.ones((1, E), jnp.float32),
        fnb=jnp.zeros((1, E), jnp.float32),
    )


def reference(x, key_padding_mask, params, nhead):
    """Pure-JAX mirror of the PyTorch forward (eval mode, norm_first, relu FFN)."""
    B, S, E = x.shape
    L = params["wqkv"].shape[0]
    H, Dh = nhead, E // nhead
    mask_add = jnp.where(key_padding_mask, -1e9, 0.0).astype(jnp.float32)  # (B, S)

    def ln(v, w, b):
        mu = v.mean(-1, keepdims=True)
        var = ((v - mu) ** 2).mean(-1, keepdims=True)
        return (v - mu) / jnp.sqrt(var + 1e-5) * w + b

    x = x + params["pos"][:S][None]
    for l in range(L):
        xn = ln(x, params["ln1w"][l, 0], params["ln1b"][l, 0])
        qkv = xn @ params["wqkv"][l].T + params["bqkv"][l, 0]
        q, k, v = jnp.split(qkv, 3, axis=-1)
        q = q.reshape(B, S, H, Dh).transpose(0, 2, 1, 3)
        k = k.reshape(B, S, H, Dh).transpose(0, 2, 1, 3)
        v = v.reshape(B, S, H, Dh).transpose(0, 2, 1, 3)
        s = jnp.einsum("bhqd,bhkd->bhqk", q, k) / math.sqrt(Dh)
        s = s + mask_add[:, None, None, :]
        p = jax.nn.softmax(s, axis=-1)
        att = jnp.einsum("bhqk,bhkd->bhqd", p, v).transpose(0, 2, 1, 3).reshape(B, S, E)
        x = x + att @ params["wo"][l].T + params["bo"][l, 0]
        xn2 = ln(x, params["ln2w"][l, 0], params["ln2b"][l, 0])
        h1 = jax.nn.relu(xn2 @ params["w1"][l].T + params["b1"][l, 0])
        x = x + h1 @ params["w2"][l].T + params["b2"][l, 0]
    return ln(x, params["fnw"][0], params["fnb"][0])


if __name__ == "__main__":
    B, max_sensors, embed_dim, nhead, num_layers = 2, 8, 32, 4, 2
    S = max_sensors

    key = jax.random.PRNGKey(0)
    kx, kp = jax.random.split(key)
    x = jax.random.normal(kx, (B, S, embed_dim), dtype=jnp.float32)
    # True = padded sensor slot (ignored as attention key).  Note: a row with ALL keys
    # padded yields uniform attention (PyTorch would produce NaN) -- not exercised here.
    key_padding_mask = jnp.array(
        [[False] * S,
         [False] * (S - 3) + [True] * 3], dtype=bool)

    params = init_params(kp, embed_dim, nhead, num_layers, max_sensors)
    ref = reference(x, key_padding_mask, params, nhead)

    # f32 matmul path (bit-accurate within fp rounding of the reference).
    out = inter_sensor_transformer(x, key_padding_mask, params, nhead=nhead)
    out = jax.block_until_ready(out)
    np.testing.assert_allclose(np.asarray(out), np.asarray(ref), rtol=2e-3, atol=2e-3)

    # bf16 MXU path (recommended on v6e/v7x): bf16 weights/operands, f32 accumulation.
    out_bf16 = inter_sensor_transformer(x, key_padding_mask, params, nhead=nhead,
                                        compute_dtype=jnp.bfloat16)
    out_bf16 = jax.block_until_ready(out_bf16)
    np.testing.assert_allclose(np.asarray(out_bf16), np.asarray(ref), rtol=5e-2, atol=5e-2)

    print("KERNEL_OK")
</pallas_src>

<mosaic_0001>
module attributes {stable_mosaic.version = 11 : i64} {
  func.func @kernel(%arg0: i32, %arg1: i32, %arg2: memref<1x8x32xf32, #tpu.memory_space<vmem>>, %arg3: memref<1x1x8xf32, #tpu.memory_space<vmem>>, %arg4: memref<8x32xf32, #tpu.memory_space<vmem>>, %arg5: memref<2x32x96xf32, #tpu.memory_space<vmem>>, %arg6: memref<2x32x32xf32, #tpu.memory_space<vmem>>, %arg7: memref<2x32x64xf32, #tpu.memory_space<vmem>>, %arg8: memref<2x64x32xf32, #tpu.memory_space<vmem>>, %arg9: memref<2x8x96xf32, #tpu.memory_space<vmem>>, %arg10: memref<2x32xf32, #tpu.memory_space<vmem>>, %arg11: memref<1x8x32xf32, #tpu.memory_space<vmem>>, %arg12: memref<1x8x32xf32, #tpu.memory_space<vmem>>) attributes {dimension_semantics = [#tpu.dimension_semantics<parallel>, #tpu.dimension_semantics<arbitrary>], iteration_bounds = array<i64: 2, 2>, scalar_prefetch = 0 : i64, scratch_operands = 1 : i64, tpu.core_type = #tpu.core_type<tc>, window_params = [{transform_indices = @transform_0, window_bounds = array<i64: 1, 8, 32>}, {transform_indices = @transform_1, window_bounds = array<i64: 1, 1, 8>}, {pipeline_mode = #tpu.pipeline_mode<synchronous>, transform_indices = @transform_2, window_bounds = array<i64: 8, 32>}, {pipeline_mode = #tpu.pipeline_mode<synchronous>, transform_indices = @transform_3, window_bounds = array<i64: 2, 32, 96>}, {pipeline_mode = #tpu.pipeline_mode<synchronous>, transform_indices = @transform_4, window_bounds = array<i64: 2, 32, 32>}, {pipeline_mode = #tpu.pipeline_mode<synchronous>, transform_indices = @transform_5, window_bounds = array<i64: 2, 32, 64>}, {pipeline_mode = #tpu.pipeline_mode<synchronous>, transform_indices = @transform_6, window_bounds = array<i64: 2, 64, 32>}, {pipeline_mode = #tpu.pipeline_mode<synchronous>, transform_indices = @transform_7, window_bounds = array<i64: 2, 8, 96>}, {pipeline_mode = #tpu.pipeline_mode<synchronous>, transform_indices = @transform_8, window_bounds = array<i64: 2, 32>}, {transform_indices = @transform_9, window_bounds = array<i64: 1, 8, 32>}]} {
    %c0_i32 = arith.constant 0 : i32
    %0 = arith.cmpi eq, %arg1, %c0_i32 : i32
    %1 = arith.extui %0 : i1 to i32
    %c0_i32_0 = arith.constant 0 : i32
    %2 = arith.cmpi ne, %1, %c0_i32_0 : i32
    scf.if %2 {
      %c0_39 = arith.constant 0 : index
      %c0_40 = arith.constant 0 : index
      %c0_41 = arith.constant 0 : index
      %159 = vector.load %arg2[%c0_39, %c0_40, %c0_41] : memref<1x8x32xf32, #tpu.memory_space<vmem>>, vector<1x8x32xf32>
      %c0_42 = arith.constant 0 : index
      %c0_43 = arith.constant 0 : index
      %160 = vector.load %arg4[%c0_42, %c0_43] : memref<8x32xf32, #tpu.memory_space<vmem>>, vector<8x32xf32>
      %161 = vector.shape_cast %160 : vector<8x32xf32> to vector<1x8x32xf32>
      %162 = arith.addf %159, %161 : vector<1x8x32xf32>
      %c0_44 = arith.constant 0 : index
      %c0_45 = arith.constant 0 : index
      %c0_46 = arith.constant 0 : index
      %163 = vector.load %arg12[%c0_44, %c0_45, %c0_46] : memref<1x8x32xf32, #tpu.memory_space<vmem>>, vector<1x8x32xf32>
      tpu.vector_store %arg12[%c0_44, %c0_45, %c0_46], %162 {strides = array<i32>} : memref<1x8x32xf32, #tpu.memory_space<vmem>>, vector<1x8x32xf32>,
    } else {
    }
    %c0 = arith.constant 0 : index
    %c0_1 = arith.constant 0 : index
    %c0_2 = arith.constant 0 : index
    %3 = vector.load %arg12[%c0, %c0_1, %c0_2] : memref<1x8x32xf32, #tpu.memory_space<vmem>>, vector<1x8x32xf32>
    %c0_3 = arith.constant 0 : index
    %c0_4 = arith.constant 0 : index
    %c0_5 = arith.constant 0 : index
    %4 = vector.load %arg3[%c0_3, %c0_4, %c0_5] : memref<1x1x8xf32, #tpu.memory_space<vmem>>, vector<1x1x8xf32>
    %5 = arith.index_cast %arg1 : i32 to index
    %c0_6 = arith.constant 0 : index
    %c0_7 = arith.constant 0 : index
    %6 = vector.load %arg9[%5, %c0_6, %c0_7] : memref<2x8x96xf32, #tpu.memory_space<vmem>>, vector<1x8x96xf32>
    %7 = vector.shape_cast %6 : vector<1x8x96xf32> to vector<8x96xf32>
    %8 = vector.extract_strided_slice %7 {offsets = [0, 0], sizes = [1, 32], strides = [1, 1]} : vector<8x96xf32> to vector<1x32xf32>
    %9 = vector.shape_cast %8 : vector<1x32xf32> to vector<32xf32>
    %10 = vector.extract_strided_slice %7 {offsets = [1, 0], sizes = [1, 32], strides = [1, 1]} : vector<8x96xf32> to vector<1x32xf32>
    %11 = vector.shape_cast %10 : vector<1x32xf32> to vector<32xf32>
    %12 = vector.extract_strided_slice %7 {offsets = [2, 0], sizes = [1, 32], strides = [1, 1]} : vector<8x96xf32> to vector<1x32xf32>
    %13 = vector.shape_cast %12 : vector<1x32xf32> to vector<32xf32>
    %14 = vector.extract_strided_slice %7 {offsets = [3, 0], sizes = [1, 32], strides = [1, 1]} : vector<8x96xf32> to vector<1x32xf32>
    %15 = vector.shape_cast %14 : vector<1x32xf32> to vector<32xf32>
    %16 = vector.extract_strided_slice %7 {offsets = [4, 0], sizes = [1, 32], strides = [1, 1]} : vector<8x96xf32> to vector<1x32xf32>
    %17 = vector.shape_cast %16 : vector<1x32xf32> to vector<32xf32>
    %18 = vector.extract_strided_slice %7 {offsets = [5, 0], sizes = [1, 32], strides = [1, 1]} : vector<8x96xf32> to vector<1x32xf32>
    %19 = vector.shape_cast %18 : vector<1x32xf32> to vector<32xf32>
    %20 = vector.extract_strided_slice %7 {offsets = [6, 0], sizes = [1, 96], strides = [1, 1]} : vector<8x96xf32> to vector<1x96xf32>
    %21 = vector.shape_cast %20 : vector<1x96xf32> to vector<96xf32>
    %22 = vector.extract_strided_slice %7 {offsets = [7, 0], sizes = [1, 64], strides = [1, 1]} : vector<8x96xf32> to vector<1x64xf32>
    %23 = vector.shape_cast %22 : vector<1x64xf32> to vector<64xf32>
    %24 = arith.index_cast %arg1 : i32 to index
    %c0_8 = arith.constant 0 : index
    %c0_9 = arith.constant 0 : index
    %25 = vector.load %arg5[%24, %c0_8, %c0_9] : memref<2x32x96xf32, #tpu.memory_space<vmem>>, vector<1x32x96xf32>
    %26 = vector.shape_cast %25 : vector<1x32x96xf32> to vector<32x96xf32>
    %27 = arith.index_cast %arg1 : i32 to index
    %c0_10 = arith.constant 0 : index
    %c0_11 = arith.constant 0 : index
    %28 = vector.load %arg6[%27, %c0_10, %c0_11] : memref<2x32x32xf32, #tpu.memory_space<vmem>>, vector<1x32x32xf32>
    %29 = vector.shape_cast %28 : vector<1x32x32xf32> to vector<32x32xf32>
    %30 = arith.index_cast %arg1 : i32 to index
    %c0_12 = arith.constant 0 : index
    %c0_13 = arith.constant 0 : index
    %31 = vector.load %arg7[%30, %c0_12, %c0_13] : memref<2x32x64xf32, #tpu.memory_space<vmem>>, vector<1x32x64xf32>
    %32 = vector.shape_cast %31 : vector<1x32x64xf32> to vector<32x64xf32>
    %33 = arith.index_cast %arg1 : i32 to index
    %c0_14 = arith.constant 0 : index
    %c0_15 = arith.constant 0 : index
    %34 = vector.load %arg8[%33, %c0_14, %c0_15] : memref<2x64x32xf32, #tpu.memory_space<vmem>>, vector<1x64x32xf32>
    %35 = vector.shape_cast %34 : vector<1x64x32xf32> to vector<64x32xf32>
    %cst = arith.constant dense<0.000000e+00> : vector<1x8xf32>
    %36 = vector.multi_reduction <add>, %3, %cst [2] : vector<1x8x32xf32> to vector<1x8xf32>
    %37 = vector.shape_cast %36 : vector<1x8xf32> to vector<1x8x1xf32>
    %cst_16 = arith.constant 3.200000e+01 : f32
    %38 = vector.broadcast %cst_16 : f32 to vector<1x8x1xf32>
    %39 = arith.divf %37, %38 : vector<1x8x1xf32>
    %40 = vector.broadcast %39 : vector<1x8x1xf32> to vector<1x8x32xf32>
    %41 = arith.subf %3, %40 : vector<1x8x32xf32>
    %42 = arith.mulf %41, %41 : vector<1x8x32xf32>
    %cst_17 = arith.constant dense<0.000000e+00> : vector<1x8xf32>
    %43 = vector.multi_reduction <add>, %42, %cst_17 [2] : vector<1x8x32xf32> to vector<1x8xf32>
    %44 = vector.shape_cast %43 : vector<1x8xf32> to vector<1x8x1xf32>
    %cst_18 = arith.constant 3.200000e+01 : f32
    %45 = vector.broadcast %cst_18 : f32 to vector<1x8x1xf32>
    %46 = arith.divf %44, %45 : vector<1x8x1xf32>
    %cst_19 = arith.constant 9.99999974E-6 : f32
    %47 = vector.broadcast %cst_19 : f32 to vector<1x8x1xf32>
    %48 = arith.addf %46, %47 : vector<1x8x1xf32>
    %49 = math.rsqrt %48 : vector<1x8x1xf32>
    %50 = vector.broadcast %49 : vector<1x8x1xf32> to vector<1x8x32xf32>
    %51 = arith.mulf %41, %50 : vector<1x8x32xf32>
    %52 = vector.shape_cast %9 : vector<32xf32> to vector<1x1x32xf32>
    %53 = vector.broadcast %52 : vector<1x1x32xf32> to vector<1x8x32xf32>
    %54 = arith.mulf %51, %53 : vector<1x8x32xf32>
    %55 = vector.shape_cast %11 : vector<32xf32> to vector<1x1x32xf32>
    %56 = vector.broadcast %55 : vector<1x1x32xf32> to vector<1x8x32xf32>
    %57 = arith.addf %54, %56 : vector<1x8x32xf32>
    %58 = vector.shape_cast %57 : vector<1x8x32xf32> to vector<8x32xf32>
    %cst_20 = arith.constant dense<0.000000e+00> : vector<8x96xf32>
    %59 = tpu.matmul %58, %26, %cst_20 {dimension_numbers = #tpu.dot_dimension_numbers<[1], [0], [0], [1], [0, 0, 1, 1], [], []>} : vector<8x32xf32>, vector<32x96xf32>, vector<8x96xf32> -> vector<8x96xf32>
    %60 = vector.shape_cast %21 : vector<96xf32> to vector<1x96xf32>
    %61 = vector.broadcast %60 : vector<1x96xf32> to vector<8x96xf32>
    %62 = arith.addf %59, %61 : vector<8x96xf32>
    %63 = vector.extract_strided_slice %62 {offsets = [0, 0], sizes = [8, 32], strides = [1, 1]} : vector<8x96xf32> to vector<8x32xf32>
    %64 = vector.shape_cast %63 : vector<8x32xf32> to vector<1x8x32xf32>
    %65 = vector.extract_strided_slice %62 {offsets = [0, 32], sizes = [8, 32], strides = [1, 1]} : vector<8x96xf32> to vector<8x32xf32>
    %66 = vector.shape_cast %65 : vector<8x32xf32> to vector<1x8x32xf32>
    %67 = vector.extract_strided_slice %62 {offsets = [0, 64], sizes = [8, 32], strides = [1, 1]} : vector<8x96xf32> to vector<8x32xf32>
    %68 = vector.shape_cast %67 : vector<8x32xf32> to vector<1x8x32xf32>
    %69 = vector.extract_strided_slice %64 {offsets = [0, 0, 0], sizes = [1, 8, 8], strides = [1, 1, 1]} : vector<1x8x32xf32> to vector<1x8x8xf32>
    %70 = vector.extract_strided_slice %64 {offsets = [0, 0, 8], sizes = [1, 8, 8], strides = [1, 1, 1]} : vector<1x8x32xf32> to vector<1x8x8xf32>
    %71 = vector.extract_strided_slice %64 {offsets = [0, 0, 16], sizes = [1, 8, 8], strides = [1, 1, 1]} : vector<1x8x32xf32> to vector<1x8x8xf32>
    %72 = vector.extract_strided_slice %64 {offsets = [0, 0, 24], sizes = [1, 8, 8], strides = [1, 1, 1]} : vector<1x8x32xf32> to vector<1x8x8xf32>
    %73 = tpu.concatenate %69, %70, %71, %72 in 0 : vector<1x8x8xf32>, vector<1x8x8xf32>, vector<1x8x8xf32>, vector<1x8x8xf32> -> vector<4x8x8xf32>
    %74 = vector.extract_strided_slice %66 {offsets = [0, 0, 0], sizes = [1, 8, 8], strides = [1, 1, 1]} : vector<1x8x32xf32> to vector<1x8x8xf32>
    %75 = vector.extract_strided_slice %66 {offsets = [0, 0, 8], sizes = [1, 8, 8], strides = [1, 1, 1]} : vector<1x8x32xf32> to vector<1x8x8xf32>
    %76 = vector.extract_strided_slice %66 {offsets = [0, 0, 16], sizes = [1, 8, 8], strides = [1, 1, 1]} : vector<1x8x32xf32> to vector<1x8x8xf32>
    %77 = vector.extract_strided_slice %66 {offsets = [0, 0, 24], sizes = [1, 8, 8], strides = [1, 1, 1]} : vector<1x8x32xf32> to vector<1x8x8xf32>
    %78 = tpu.concatenate %74, %75, %76, %77 in 0 : vector<1x8x8xf32>, vector<1x8x8xf32>, vector<1x8x8xf32>, vector<1x8x8xf32> -> vector<4x8x8xf32>
    %79 = vector.extract_strided_slice %68 {offsets = [0, 0, 0], sizes = [1, 8, 8], strides = [1, 1, 1]} : vector<1x8x32xf32> to vector<1x8x8xf32>
    %80 = vector.extract_strided_slice %68 {offsets = [0, 0, 8], sizes = [1, 8, 8], strides = [1, 1, 1]} : vector<1x8x32xf32> to vector<1x8x8xf32>
    %81 = vector.extract_strided_slice %68 {offsets = [0, 0, 16], sizes = [1, 8, 8], strides = [1, 1, 1]} : vector<1x8x32xf32> to vector<1x8x8xf32>
    %82 = vector.extract_strided_slice %68 {offsets = [0, 0, 24], sizes = [1, 8, 8], strides = [1, 1, 1]} : vector<1x8x32xf32> to vector<1x8x8xf32>
    %83 = tpu.concatenate %79, %80, %81, %82 in 0 : vector<1x8x8xf32>, vector<1x8x8xf32>, vector<1x8x8xf32>, vector<1x8x8xf32> -> vector<4x8x8xf32>
    "tpu.trace_start"() <{level = 10 : i32, message = "bqd,bkd->bqk"}> : () -> ()
    %cst_21 = arith.constant dense<0.000000e+00> : vector<4x8x8xf32>
    %84 = tpu.matmul %73, %78, %cst_21 {dimension_numbers = #tpu.dot_dimension_numbers<[2], [2], [1], [1], [0, 0, 0, 1, 1, 1], [0], [0]>} : vector<4x8x8xf32>, vector<4x8x8xf32>, vector<4x8x8xf32> -> vector<4x8x8xf32>
    "tpu.trace_stop"() : () -> ()
    %cst_22 = arith.constant 0.353553385 : f32
    %85 = vector.broadcast %cst_22 : f32 to vector<4x8x8xf32>
    %86 = arith.mulf %84, %85 : vector<4x8x8xf32>
    %87 = vector.shape_cast %86 : vector<4x8x8xf32> to vector<4x1x8x8xf32>
    %88 = vector.shape_cast %4 : vector<1x1x8xf32> to vector<1x1x1x8xf32>
    %89 = vector.broadcast %88 : vector<1x1x1x8xf32> to vector<4x1x8x8xf32>
    %90 = arith.addf %87, %89 : vector<4x1x8x8xf32>
    %cst_23 = arith.constant dense<0xFF800000> : vector<4x1x8xf32>
    %91 = vector.multi_reduction <maximumf>, %90, %cst_23 [3] : vector<4x1x8x8xf32> to vector<4x1x8xf32>
    %92 = vector.shape_cast %91 : vector<4x1x8xf32> to vector<4x1x8x1xf32>
    %93 = vector.broadcast %92 : vector<4x1x8x1xf32> to vector<4x1x8x8xf32>
    %94 = arith.subf %90, %93 : vector<4x1x8x8xf32>
    %95 = math.exp %94 : vector<4x1x8x8xf32>
    %cst_24 = arith.constant dense<0.000000e+00> : vector<4x1x8xf32>
    %96 = vector.multi_reduction <add>, %95, %cst_24 [3] : vector<4x1x8x8xf32> to vector<4x1x8xf32>
    %97 = vector.shape_cast %96 : vector<4x1x8xf32> to vector<4x1x8x1xf32>
    %98 = tpu.reciprocal %97 : vector<4x1x8x1xf32> -> vector<4x1x8x1xf32>
    %99 = vector.broadcast %98 : vector<4x1x8x1xf32> to vector<4x1x8x8xf32>
    %100 = arith.mulf %95, %99 : vector<4x1x8x8xf32>
    %101 = vector.shape_cast %100 : vector<4x1x8x8xf32> to vector<4x8x8xf32>
    "tpu.trace_start"() <{level = 10 : i32, message = "bqk,bkd->bqd"}> : () -> ()
    %cst_25 = arith.constant dense<0.000000e+00> : vector<4x8x8xf32>
    %102 = tpu.matmul %101, %83, %cst_25 {dimension_numbers = #tpu.dot_dimension_numbers<[2], [1], [1], [2], [0, 0, 0, 1, 1, 2], [0], [0]>} : vector<4x8x8xf32>, vector<4x8x8xf32>, vector<4x8x8xf32> -> vector<4x8x8xf32>
    "tpu.trace_stop"() : () -> ()
    %103 = vector.shape_cast %102 : vector<4x8x8xf32> to vector<4x1x8x8xf32>
    %104 = vector.extract_strided_slice %103 {offsets = [0, 0, 0, 0], sizes = [1, 1, 8, 8], strides = [1, 1, 1, 1]} : vector<4x1x8x8xf32> to vector<1x1x8x8xf32>
    %105 = vector.shape_cast %104 : vector<1x1x8x8xf32> to vector<1x8x8xf32>
    %106 = vector.extract_strided_slice %103 {offsets = [1, 0, 0, 0], sizes = [1, 1, 8, 8], strides = [1, 1, 1, 1]} : vector<4x1x8x8xf32> to vector<1x1x8x8xf32>
    %107 = vector.shape_cast %106 : vector<1x1x8x8xf32> to vector<1x8x8xf32>
    %108 = vector.extract_strided_slice %103 {offsets = [2, 0, 0, 0], sizes = [1, 1, 8, 8], strides = [1, 1, 1, 1]} : vector<4x1x8x8xf32> to vector<1x1x8x8xf32>
    %109 = vector.shape_cast %108 : vector<1x1x8x8xf32> to vector<1x8x8xf32>
    %110 = vector.extract_strided_slice %103 {offsets = [3, 0, 0, 0], sizes = [1, 1, 8, 8], strides = [1, 1, 1, 1]} : vector<4x1x8x8xf32> to vector<1x1x8x8xf32>
    %111 = vector.shape_cast %110 : vector<1x1x8x8xf32> to vector<1x8x8xf32>
    %112 = tpu.concatenate %105, %107, %109, %111 in 2 : vector<1x8x8xf32>, vector<1x8x8xf32>, vector<1x8x8xf32>, vector<1x8x8xf32> -> vector<1x8x32xf32>
    %113 = vector.shape_cast %112 : vector<1x8x32xf32> to vector<8x32xf32>
    %cst_26 = arith.constant dense<0.000000e+00> : vector<8x32xf32>
    %114 = tpu.matmul %113, %29, %cst_26 {dimension_numbers = #tpu.dot_dimension_numbers<[1], [0], [0], [1], [0, 0, 1, 1], [], []>} : vector<8x32xf32>, vector<32x32xf32>, vector<8x32xf32> -> vector<8x32xf32>
    %115 = vector.shape_cast %17 : vector<32xf32> to vector<1x32xf32>
    %116 = vector.broadcast %115 : vector<1x32xf32> to vector<8x32xf32>
    %117 = arith.addf %114, %116 : vector<8x32xf32>
    %118 = vector.shape_cast %117 : vector<8x32xf32> to vector<1x8x32xf32>
    %119 = arith.addf %3, %118 : vector<1x8x32xf32>
    %cst_27 = arith.constant dense<0.000000e+00> : vector<1x8xf32>
    %120 = vector.multi_reduction <add>, %119, %cst_27 [2] : vector<1x8x32xf32> to vector<1x8xf32>
    %121 = vector.shape_cast %120 : vector<1x8xf32> to vector<1x8x1xf32>
    %cst_28 = arith.constant 3.200000e+01 : f32
    %122 = vector.broadcast %cst_28 : f32 to vector<1x8x1xf32>
    %123 = arith.divf %121, %122 : vector<1x8x1xf32>
    %124 = vector.broadcast %123 : vector<1x8x1xf32> to vector<1x8x32xf32>
    %125 = arith.subf %119, %124 : vector<1x8x32xf32>
    %126 = arith.mulf %125, %125 : vector<1x8x32xf32>
    %cst_29 = arith.constant dense<0.000000e+00> : vector<1x8xf32>
    %127 = vector.multi_reduction <add>, %126, %cst_29 [2] : vector<1x8x32xf32> to vector<1x8xf32>
    %128 = vector.shape_cast %127 : vector<1x8xf32> to vector<1x8x1xf32>
    %cst_30 = arith.constant 3.200000e+01 : f32
    %129 = vector.broadcast %cst_30 : f32 to vector<1x8x1xf32>
    %130 = arith.divf %128, %129 : vector<1x8x1xf32>
    %cst_31 = arith.constant 9.99999974E-6 : f32
    %131 = vector.broadcast %cst_31 : f32 to vector<1x8x1xf32>
    %132 = arith.addf %130, %131 : vector<1x8x1xf32>
    %133 = math.rsqrt %132 : vector<1x8x1xf32>
    %134 = vector.broadcast %133 : vector<1x8x1xf32> to vector<1x8x32xf32>
    %135 = arith.mulf %125, %134 : vector<1x8x32xf32>
    %136 = vector.shape_cast %13 : vector<32xf32> to vector<1x1x32xf32>
    %137 = vector.broadcast %136 : vector<1x1x32xf32> to vector<1x8x32xf32>
    %138 = arith.mulf %135, %137 : vector<1x8x32xf32>
    %139 = vector.shape_cast %15 : vector<32xf32> to vector<1x1x32xf32>
    %140 = vector.broadcast %139 : vector<1x1x32xf32> to vector<1x8x32xf32>
    %141 = arith.addf %138, %140 : vector<1x8x32xf32>
    %142 = vector.shape_cast %141 : vector<1x8x32xf32> to vector<8x32xf32>
    %cst_32 = arith.constant dense<0.000000e+00> : vector<8x64xf32>
    %143 = tpu.matmul %142, %32, %cst_32 {dimension_numbers = #tpu.dot_dimension_numbers<[1], [0], [0], [1], [0, 0, 1, 1], [], []>} : vector<8x32xf32>, vector<32x64xf32>, vector<8x64xf32> -> vector<8x64xf32>
    %144 = vector.shape_cast %23 : vector<64xf32> to vector<1x64xf32>
    %145 = vector.broadcast %144 : vector<1x64xf32> to vector<8x64xf32>
    %146 = arith.addf %143, %145 : vector<8x64xf32>
    %cst_33 = arith.constant 0.000000e+00 : f32
    %147 = vector.broadcast %cst_33 : f32 to vector<8x64xf32>
    %148 = arith.maximumf %146, %147 : vector<8x64xf32>
    %cst_34 = arith.constant dense<0.000000e+00> : vector<8x32xf32>
    %149 = tpu.matmul %148, %35, %cst_34 {dimension_numbers = #tpu.dot_dimension_numbers<[1], [0], [0], [1], [0, 0, 1, 1], [], []>} : vector<8x64xf32>, vector<64x32xf32>, vector<8x32xf32> -> vector<8x32xf32>
    %150 = vector.shape_cast %19 : vector<32xf32> to vector<1x32xf32>
    %151 = vector.broadcast %150 : vector<1x32xf32> to vector<8x32xf32>
    %152 = arith.addf %149, %151 : vector<8x32xf32>
    %153 = vector.shape_cast %152 : vector<8x32xf32> to vector<1x8x32xf32>
    %154 = arith.addf %119, %153 : vector<1x8x32xf32>
    %c0_35 = arith.constant 0 : index
    %c0_36 = arith.constant 0 : index
    %c0_37 = arith.constant 0 : index
    %155 = vector.load %arg12[%c0_35, %c0_36, %c0_37] : memref<1x8x32xf32, #tpu.memory_space<vmem>>, vector<1x8x32xf32>
    tpu.vector_store %arg12[%c0_35, %c0_36, %c0_37], %154 {strides = array<i32>} : memref<1x8x32xf32, #tpu.memory_space<vmem>>, vector<1x8x32xf32>,
    %c1_i32 = arith.constant 1 : i32
    %156 = arith.cmpi eq, %arg1, %c1_i32 : i32
    %157 = arith.extui %156 : i1 to i32
    %c0_i32_38 = arith.constant 0 : i32
    %158 = arith.cmpi ne, %157, %c0_i32_38 : i32
    scf.if %158 {
      %c0_39 = arith.constant 0 : index
      %c0_40 = arith.constant 0 : index
      %159 = vector.load %arg10[%c0_39, %c0_40] : memref<2x32xf32, #tpu.memory_space<vmem>>, vector<1x32xf32>
      %160 = vector.shape_cast %159 : vector<1x32xf32> to vector<32xf32>
      %c1 = arith.constant 1 : index
      %c0_41 = arith.constant 0 : index
      %161 = vector.load %arg10[%c1, %c0_41] : memref<2x32xf32, #tpu.memory_space<vmem>>, vector<1x32xf32>
      %162 = vector.shape_cast %161 : vector<1x32xf32> to vector<32xf32>
      %cst_42 = arith.constant dense<0.000000e+00> : vector<1x8xf32>
      %163 = vector.multi_reduction <add>, %154, %cst_42 [2] : vector<1x8x32xf32> to vector<1x8xf32>
      %164 = vector.shape_cast %163 : vector<1x8xf32> to vector<1x8x1xf32>
      %cst_43 = arith.constant 3.200000e+01 : f32
      %165 = vector.broadcast %cst_43 : f32 to vector<1x8x1xf32>
      %166 = arith.divf %164, %165 : vector<1x8x1xf32>
      %167 = vector.broadcast %166 : vector<1x8x1xf32> to vector<1x8x32xf32>
      %168 = arith.subf %154, %167 : vector<1x8x32xf32>
      %169 = arith.mulf %168, %168 : vector<1x8x32xf32>
      %cst_44 = arith.constant dense<0.000000e+00> : vector<1x8xf32>
      %170 = vector.multi_reduction <add>, %169, %cst_44 [2] : vector<1x8x32xf32> to vector<1x8xf32>
      %171 = vector.shape_cast %170 : vector<1x8xf32> to vector<1x8x1xf32>
      %cst_45 = arith.constant 3.200000e+01 : f32
      %172 = vector.broadcast %cst_45 : f32 to vector<1x8x1xf32>
      %173 = arith.divf %171, %172 : vector<1x8x1xf32>
      %cst_46 = arith.constant 9.99999974E-6 : f32
      %174 = vector.broadcast %cst_46 : f32 to vector<1x8x1xf32>
      %175 = arith.addf %173, %174 : vector<1x8x1xf32>
      %176 = math.rsqrt %175 : vector<1x8x1xf32>
      %177 = vector.broadcast %176 : vector<1x8x1xf32> to vector<1x8x32xf32>
      %178 = arith.mulf %168, %177 : vector<1x8x32xf32>
      %179 = vector.shape_cast %160 : vector<32xf32> to vector<1x1x32xf32>
      %180 = vector.broadcast %179 : vector<1x1x32xf32> to vector<1x8x32xf32>
      %181 = arith.mulf %178, %180 : vector<1x8x32xf32>
      %182 = vector.shape_cast %162 : vector<32xf32> to vector<1x1x32xf32>
      %183 = vector.broadcast %182 : vector<1x1x32xf32> to vector<1x8x32xf32>
      %184 = arith.addf %181, %183 : vector<1x8x32xf32>
      %c0_47 = arith.constant 0 : index
      %c0_48 = arith.constant 0 : index
      %c0_49 = arith.constant 0 : index
      %185 = vector.load %arg11[%c0_47, %c0_48, %c0_49] : memref<1x8x32xf32, #tpu.memory_space<vmem>>, vector<1x8x32xf32>
      tpu.vector_store %arg11[%c0_47, %c0_48, %c0_49], %184 {strides = array<i32>} : memref<1x8x32xf32, #tpu.memory_space<vmem>>, vector<1x8x32xf32>,
    } else {
    }
    return
  }
  func.func @transform_0(%arg0: i32, %arg1: i32) -> (i32, i32, i32) {
    %c0_i32 = arith.constant 0 : i32
    %c0_i32_0 = arith.constant 0 : i32
    %c0_i32_1 = arith.constant 0 : i32
    return %arg0, %c0_i32, %c0_i32_0 : i32, i32, i32
  }
  func.func @transform_1(%arg0: i32, %arg1: i32) -> (i32, i32, i32) {
    %c0_i32 = arith.constant 0 : i32
    %c0_i32_0 = arith.constant 0 : i32
    %c0_i32_1 = arith.constant 0 : i32
    return %arg0, %c0_i32, %c0_i32_0 : i32, i32, i32
  }
  func.func @transform_2(%arg0: i32, %arg1: i32) -> (i32, i32) {
    %c0_i32 = arith.constant 0 : i32
    %c0_i32_0 = arith.constant 0 : i32
    %c0_i32_1 = arith.constant 0 : i32
    return %c0_i32, %c0_i32_0 : i32, i32
  }
  func.func @transform_3(%arg0: i32, %arg1: i32) -> (i32, i32, i32) {
    %c0_i32 = arith.constant 0 : i32
    %c0_i32_0 = arith.constant 0 : i32
    %c0_i32_1 = arith.constant 0 : i32
    %c0_i32_2 = arith.constant 0 : i32
    return %c0_i32, %c0_i32_0, %c0_i32_1 : i32, i32, i32
  }
  func.func @transform_4(%arg0: i32, %arg1: i32) -> (i32, i32, i32) {
    %c0_i32 = arith.constant 0 : i32
    %c0_i32_0 = arith.constant 0 : i32
    %c0_i32_1 = arith.constant 0 : i32
    %c0_i32_2 = arith.constant 0 : i32
    return %c0_i32, %c0_i32_0, %c0_i32_1 : i32, i32, i32
  }
  func.func @transform_5(%arg0: i32, %arg1: i32) -> (i32, i32, i32) {
    %c0_i32 = arith.constant 0 : i32
    %c0_i32_0 = arith.constant 0 : i32
    %c0_i32_1 = arith.constant 0 : i32
    %c0_i32_2 = arith.constant 0 : i32
    return %c0_i32, %c0_i32_0, %c0_i32_1 : i32, i32, i32
  }
  func.func @transform_6(%arg0: i32, %arg1: i32) -> (i32, i32, i32) {
    %c0_i32 = arith.constant 0 : i32
    %c0_i32_0 = arith.constant 0 : i32
    %c0_i32_1 = arith.constant 0 : i32
    %c0_i32_2 = arith.constant 0 : i32
    return %c0_i32, %c0_i32_0, %c0_i32_1 : i32, i32, i32
  }
  func.func @transform_7(%arg0: i32, %arg1: i32) -> (i32, i32, i32) {
    %c0_i32 = arith.constant 0 : i32
    %c0_i32_0 = arith.constant 0 : i32
    %c0_i32_1 = arith.constant 0 : i32
    %c0_i32_2 = arith.constant 0 : i32
    return %c0_i32, %c0_i32_0, %c0_i32_1 : i32, i32, i32
  }
  func.func @transform_8(%arg0: i32, %arg1: i32) -> (i32, i32) {
    %c0_i32 = arith.constant 0 : i32
    %c0_i32_0 = arith.constant 0 : i32
    %c0_i32_1 = arith.constant 0 : i32
    return %c0_i32, %c0_i32_0 : i32, i32
  }
  func.func @transform_9(%arg0: i32, %arg1: i32) -> (i32, i32, i32) {
    %c0_i32 = arith.constant 0 : i32
    %c0_i32_0 = arith.constant 0 : i32
    %c0_i32_1 = arith.constant 0 : i32
    return %arg0, %c0_i32, %c0_i32_0 : i32, i32, i32
  }
}

</mosaic_0001>

<llo_original>
// kernel: tpu_custom_call.1
$region0: #{tpu_custom_call.1}
  #allocation0 [shape = 'u32[]', space=smem, size = 0x4, offset = 0x4, fixed_abs, tag = 'smem constant byte address 0x4 - core index']
  #allocation1 [shape = 'u32[144,128]{1,0:T(1,128)}', space=vmem, size = 0x12000, scoped, tag = 'internal scratch']
  #allocation2 [shape = 'f32[1,8,32]{2,1,0:T(8,128)}', space=vmem, size = 0x1000, scoped, tag = 'scratch operand']
  %s0 = inlined_call_operand.hbm [shape: f32[2,8,32], index: 0, kind: input, shape index: {}]
  %s1 = inlined_call_operand.vmem [shape: f32[2,1,8], index: 1, kind: input, shape index: {}]
  %s2 = inlined_call_operand.hbm [shape: f32[8,32], index: 2, kind: input, shape index: {}]
  %s3 = inlined_call_operand.vmem [shape: f32[2,32,96], index: 3, kind: input, shape index: {}]
  %s4 = inlined_call_operand.vmem [shape: f32[2,32,32], index: 4, kind: input, shape index: {}]
  %s5 = inlined_call_operand.vmem [shape: f32[2,32,64], index: 5, kind: input, shape index: {}]
  %s6 = inlined_call_operand.vmem [shape: f32[2,64,32], index: 6, kind: input, shape index: {}]
  %s7 = inlined_call_operand.vmem [shape: f32[2,8,96], index: 7, kind: input, shape index: {}]
  %s8 = inlined_call_operand.vmem [shape: f32[2,32], index: 8, kind: input, shape index: {}]
  %s9 = inlined_call_operand.hbm [shape: f32[2,8,32], index: 9, kind: output, shape index: {}]
  %s10 = sld [smem:[#allocation0]]
  $region85: #{tpu_custom_call.1} parent=0
    _
  %s12 = ssub.s32 1, %s10
  %s13 = scalar_select 0, %s12, %s10
  $region1: #{tpu_custom_call.1} parent=0
    #allocation3 [shape = 'u8[8192]{0}', space=vmem, size = 0x2000, scoped, tag = 'input window, operand 0']
    #allocation4 [shape = 's32[2]{0}', space=sflag, size = 0x8, scoped, tag = 'scoped memory for tpu_custom_call.1']
    #allocation5 [shape = 's32[2]{0}', space=sflag, size = 0x8, scoped, tag = 'scoped memory for tpu_custom_call.1']
    #allocation6 [shape = 'u8[4096]{0}', space=vmem, size = 0x1000, scoped, tag = 'input window, operand 2, single buffered']
    #allocation7 [shape = 's32[1]{0}', space=sflag, size = 0x4, scoped, tag = 'scoped memory for tpu_custom_call.1']
    #allocation8 [shape = 'u8[8192]{0}', space=vmem, size = 0x2000, scoped, tag = 'output window, operand 0']
    %14 = vsyncpa [#allocation4], 0
    %s15 = scalar_lea.sflag [#allocation4], 1
    %16 = vsyncpa %s15, 0
    %17 = vsyncpa [#allocation7], 0
    %18 = vsyncpa [#allocation5], 0
    %s19 = scalar_lea.sflag [#allocation5], 1
    %20 = vsyncpa %s19, 0
    loop: start=0, step=1, limit=6
    $region2: #{tpu_custom_call.1} parent=1 // loop_pre_header
      _
    $region3: #{tpu_custom_call.1} parent=1 // loop_header
      %s22 = sphi 0, %s26
      %p23 = scmp.ge.s32.totalorder %s22, 6
      %s29 = sphi 0, %s41
      %s30 = sphi 0, %s37
      %s31 = sphi 0, %s29
      %s32 = sphi 0, %s30
      %s33 = sphi 0, %s31
      %s34 = sphi 0, %s32
      %s44 = sphi 0, %s46
      %s47 = sphi 0, %s44
      %s48 = sphi 0, %s47
      %s64 = sphi 0, %s48
      %s70 = sphi 0, %s72
      %s73 = sphi 0, %s70
      %s74 = sphi 0, %s73
      %s90 = sphi 0, %s74
      %s94 = sphi 0, %s94
      %s96 = sphi 0, %s94
      %s97 = sphi 0, %s96
      %s111 = sphi 0, %s97
      %s115 = sphi 0, %s115
      %s117 = sphi 0, %s115
      %s118 = sphi 0, %s117
      %s132 = sphi 0, %s118
      %s136 = sphi 0, %s136
      %s138 = sphi 0, %s136
      %s139 = sphi 0, %s138
      %s153 = sphi 0, %s139
      %s157 = sphi 0, %s157
      %s159 = sphi 0, %s157
      %s160 = sphi 0, %s159
      %s174 = sphi 0, %s160
      %s178 = sphi 0, %s178
      %s180 = sphi 0, %s178
      %s181 = sphi 0, %s180
      %s195 = sphi 0, %s181
      %s199 = sphi 0, %s199
      %s201 = sphi 0, %s199
      %s202 = sphi 0, %s201
      %s216 = sphi 0, %s202
      %s220 = sphi 0, %s220
      %s222 = sphi 0, %s220
      %s223 = sphi 0, %s222
      %s237 = sphi 0, %s223
      %s243 = sphi 0, %s245
      %s246 = sphi 0, %s243
      %s247 = sphi 0, %s246
      %s263 = sphi 0, %s247
    $region4: #{tpu_custom_call.1} parent=1 // loop_header_branch
      %25 = sbr.rel (%p23) target = $region8
    $region5: #{tpu_custom_call.1} parent=1 // loop_body
      %s27 = ssub.s32 %s22, 1
      %s28 = ssub.s32 %s22, 2
      %s35 = sadd.s32 1, %s30
      %p36 = scmp.ge.s32.totalorder %s35, 2
      %s37 = scalar_select %p36, 0, %s35
      %s38 = sadd.s32 1, %s29
      %s39 = scalar_select %p36, %s38, %s29
      %p40 = scmp.ge.s32.totalorder %s39, 2
      %s41 = scalar_select %p40, 0, %s39
      %s42 = ssub.s32 %s29, %s41
      %p43 = scmp.eq.s32.totalorder %s42, 0
      %s45 = sadd.s32 %s44, 1
      %s46 = scalar_select %p43, %s44, %s45
      %p49 = pneg %p43
      %p50 = scmp.eq.s32.totalorder %s22, 3
      %p51 = por %p49, %p50
      %p52 = scmp.ne.s32.totalorder %s44, %s47
      %p53 = scmp.eq.s32.totalorder %s22, 0
      %p54 = por %p52, %p53
      %p55 = scmp.ne.s32.totalorder %s44, %s47
      %p56 = scmp.eq.s32.totalorder %s27, 3
      %p57 = por %p55, %p56
      %p58 = scmp.ne.s32.totalorder %s47, %s48
      %p59 = scmp.eq.s32.totalorder %s27, 0
      %p60 = por %p58, %p59
      %p61 = scmp.ne.s32.totalorder %s47, %s48
      %p62 = scmp.eq.s32.totalorder %s28, 3
      %p63 = por %p61, %p62
      %p65 = scmp.ne.s32.totalorder %s48, %s64
      %p66 = scmp.eq.s32.totalorder %s28, 0
      %p67 = por %p65, %p66
      %s68 = ssub.s32 %s29, %s41
      %p69 = scmp.eq.s32.totalorder %s68, 0
      %s71 = sadd.s32 %s70, 1
      %s72 = scalar_select %p69, %s70, %s71
      %p75 = pneg %p69
      %p76 = scmp.eq.s32.totalorder %s22, 3
      %p77 = por %p75, %p76
      %p78 = scmp.ne.s32.totalorder %s70, %s73
      %p79 = scmp.eq.s32.totalorder %s22, 0
      %p80 = por %p78, %p79
      %p81 = scmp.ne.s32.totalorder %s70, %s73
      %p82 = scmp.eq.s32.totalorder %s27, 3
      %p83 = por %p81, %p82
      %p84 = scmp.ne.s32.totalorder %s73, %s74
      %p85 = scmp.eq.s32.totalorder %s27, 0
      %p86 = por %p84, %p85
      %p87 = scmp.ne.s32.totalorder %s73, %s74
      %p88 = scmp.eq.s32.totalorder %s28, 3
      %p89 = por %p87, %p88
      %p91 = scmp.ne.s32.totalorder %s74, %s90
      %p92 = scmp.eq.s32.totalorder %s28, 0
      %p93 = por %p91, %p92
      %s95 = sadd.s32 %s94, 1
      %p98 = scmp.eq.s32.totalorder %s22, 3
      %p99 = scmp.ne.s32.totalorder %s94, %s96
      %p100 = scmp.eq.s32.totalorder %s22, 0
      %p101 = por %p99, %p100
      %p102 = scmp.ne.s32.totalorder %s94, %s96
      %p103 = scmp.eq.s32.totalorder %s27, 3
      %p104 = por %p102, %p103
      %p105 = scmp.ne.s32.totalorder %s96, %s97
      %p106 = scmp.eq.s32.totalorder %s27, 0
      %p107 = por %p105, %p106
      %p108 = scmp.ne.s32.totalorder %s96, %s97
      %p109 = scmp.eq.s32.totalorder %s28, 3
      %p110 = por %p108, %p109
      %p112 = scmp.ne.s32.totalorder %s97, %s111
      %p113 = scmp.eq.s32.totalorder %s28, 0
      %p114 = por %p112, %p113
      %s116 = sadd.s32 %s115, 1
      %p119 = scmp.eq.s32.totalorder %s22, 3
      %p120 = scmp.ne.s32.totalorder %s115, %s117
      %p121 = scmp.eq.s32.totalorder %s22, 0
      %p122 = por %p120, %p121
      %p123 = scmp.ne.s32.totalorder %s115, %s117
      %p124 = scmp.eq.s32.totalorder %s27, 3
      %p125 = por %p123, %p124
      %p126 = scmp.ne.s32.totalorder %s117, %s118
      %p127 = scmp.eq.s32.totalorder %s27, 0
      %p128 = por %p126, %p127
      %p129 = scmp.ne.s32.totalorder %s117, %s118
      %p130 = scmp.eq.s32.totalorder %s28, 3
      %p131 = por %p129, %p130
      %p133 = scmp.ne.s32.totalorder %s118, %s132
      %p134 = scmp.eq.s32.totalorder %s28, 0
      %p135 = por %p133, %p134
      %s137 = sadd.s32 %s136, 1
      %p140 = scmp.eq.s32.totalorder %s22, 3
      %p141 = scmp.ne.s32.totalorder %s136, %s138
      %p142 = scmp.eq.s32.totalorder %s22, 0
      %p143 = por %p141, %p142
      %p144 = scmp.ne.s32.totalorder %s136, %s138
      %p145 = scmp.eq.s32.totalorder %s27, 3
      %p146 = por %p144, %p145
      %p147 = scmp.ne.s32.totalorder %s138, %s139
      %p148 = scmp.eq.s32.totalorder %s27, 0
      %p149 = por %p147, %p148
      %p150 = scmp.ne.s32.totalorder %s138, %s139
      %p151 = scmp.eq.s32.totalorder %s28, 3
      %p152 = por %p150, %p151
      %p154 = scmp.ne.s32.totalorder %s139, %s153
      %p155 = scmp.eq.s32.totalorder %s28, 0
      %p156 = por %p154, %p155
      %s158 = sadd.s32 %s157, 1
      %p161 = scmp.eq.s32.totalorder %s22, 3
      %p162 = scmp.ne.s32.totalorder %s157, %s159
      %p163 = scmp.eq.s32.totalorder %s22, 0
      %p164 = por %p162, %p163
      %p165 = scmp.ne.s32.totalorder %s157, %s159
      %p166 = scmp.eq.s32.totalorder %s27, 3
      %p167 = por %p165, %p166
      %p168 = scmp.ne.s32.totalorder %s159, %s160
      %p169 = scmp.eq.s32.totalorder %s27, 0
      %p170 = por %p168, %p169
      %p171 = scmp.ne.s32.totalorder %s159, %s160
      %p172 = scmp.eq.s32.totalorder %s28, 3
      %p173 = por %p171, %p172
      %p175 = scmp.ne.s32.totalorder %s160, %s174
      %p176 = scmp.eq.s32.totalorder %s28, 0
      %p177 = por %p175, %p176
      %s179 = sadd.s32 %s178, 1
      %p182 = scmp.eq.s32.totalorder %s22, 3
      %p183 = scmp.ne.s32.totalorder %s178, %s180
      %p184 = scmp.eq.s32.totalorder %s22, 0
      %p185 = por %p183, %p184
      %p186 = scmp.ne.s32.totalorder %s178, %s180
      %p187 = scmp.eq.s32.totalorder %s27, 3
      %p188 = por %p186, %p187
      %p189 = scmp.ne.s32.totalorder %s180, %s181
      %p190 = scmp.eq.s32.totalorder %s27, 0
      %p191 = por %p189, %p190
      %p192 = scmp.ne.s32.totalorder %s180, %s181
      %p193 = scmp.eq.s32.totalorder %s28, 3
      %p194 = por %p192, %p193
      %p196 = scmp.ne.s32.totalorder %s181, %s195
      %p197 = scmp.eq.s32.totalorder %s28, 0
      %p198 = por %p196, %p197
      %s200 = sadd.s32 %s199, 1
      %p203 = scmp.eq.s32.totalorder %s22, 3
      %p204 = scmp.ne.s32.totalorder %s199, %s201
      %p205 = scmp.eq.s32.totalorder %s22, 0
      %p206 = por %p204, %p205
      %p207 = scmp.ne.s32.totalorder %s199, %s201
      %p208 = scmp.eq.s32.totalorder %s27, 3
      %p209 = por %p207, %p208
      %p210 = scmp.ne.s32.totalorder %s201, %s202
      %p211 = scmp.eq.s32.totalorder %s27, 0
      %p212 = por %p210, %p211
      %p213 = scmp.ne.s32.totalorder %s201, %s202
      %p214 = scmp.eq.s32.totalorder %s28, 3
      %p215 = por %p213, %p214
      %p217 = scmp.ne.s32.totalorder %s202, %s216
      %p218 = scmp.eq.s32.totalorder %s28, 0
      %p219 = por %p217, %p218
      %s221 = sadd.s32 %s220, 1
      %p224 = scmp.eq.s32.totalorder %s22, 3
      %p225 = scmp.ne.s32.totalorder %s220, %s222
      %p226 = scmp.eq.s32.totalorder %s22, 0
      %p227 = por %p225, %p226
      %p228 = scmp.ne.s32.totalorder %s220, %s222
      %p229 = scmp.eq.s32.totalorder %s27, 3
      %p230 = por %p228, %p229
      %p231 = scmp.ne.s32.totalorder %s222, %s223
      %p232 = scmp.eq.s32.totalorder %s27, 0
      %p233 = por %p231, %p232
      %p234 = scmp.ne.s32.totalorder %s222, %s223
      %p235 = scmp.eq.s32.totalorder %s28, 3
      %p236 = por %p234, %p235
      %p238 = scmp.ne.s32.totalorder %s223, %s237
      %p239 = scmp.eq.s32.totalorder %s28, 0
      %p240 = por %p238, %p239
      %s241 = ssub.s32 %s29, %s41
      %p242 = scmp.eq.s32.totalorder %s241, 0
      %s244 = sadd.s32 %s243, 1
      %s245 = scalar_select %p242, %s243, %s244
      %p248 = pneg %p242
      %p249 = scmp.eq.s32.totalorder %s22, 3
      %p250 = por %p248, %p249
      %p251 = scmp.ne.s32.totalorder %s243, %s246
      %p252 = scmp.eq.s32.totalorder %s22, 0
      %p253 = por %p251, %p252
      %p254 = scmp.ne.s32.totalorder %s243, %s246
      %p255 = scmp.eq.s32.totalorder %s27, 3
      %p256 = por %p254, %p255
      %p257 = scmp.ne.s32.totalorder %s246, %s247
      %p258 = scmp.eq.s32.totalorder %s27, 0
      %p259 = por %p257, %p258
      %p260 = scmp.ne.s32.totalorder %s246, %s247
      %p261 = scmp.eq.s32.totalorder %s28, 3
      %p262 = por %p260, %p261
      %p264 = scmp.ne.s32.totalorder %s247, %s263
      %p265 = scmp.eq.s32.totalorder %s28, 0
      %p266 = por %p264, %p265
      %p267 = scmp.le.s32.totalorder 1, %s22
      %p268 = scmp.lt.s32.totalorder %s22, 5
      %p269 = pnand %p267, %p268
      %p270 = pneg %p269
      // Predicated region
      $region9: #{tpu_custom_call.1} parent=5 // pred_check
        _
      $region10: #{tpu_custom_call.1} parent=5 // pred_check_branch
        %272 = sbr.rel (%p269) target = $region12
      $region11: #{tpu_custom_call.1} parent=5 // pred_region
        %s273 = ssub.s32 %s22, 1
        // Predicated region
        $region13: #{tpu_custom_call.1} parent=11 // pred_check
          %p274 = pneg %p107
        $region14: #{tpu_custom_call.1} parent=11 // pred_check_branch
          %276 = sbr.rel (%p274) target = $region16
        $region15: #{tpu_custom_call.1} parent=11 // pred_region
          %s278 = ssub.s32 128, 128
          %279 = vsyncadd [#allocation7], %s278
          %s281 = sshll.u32 [#allocation6], 4
          %s282 = int_to_ptr.vmem [resolvable:$true] %s281
          %284 = dma.hbm_to_vmem [thread:$0]  %s2, 128, %s282, [#allocation7]
        $region16: #{tpu_custom_call.1} parent=11 // pred_fallthru
          _
        // Predicated region
        $region17: #{tpu_custom_call.1} parent=11 // pred_check
          %p285 = pneg %p128
        $region18: #{tpu_custom_call.1} parent=11 // pred_check_branch
          %287 = sbr.rel (%p285) target = $region20
        $region19: #{tpu_custom_call.1} parent=11 // pred_region
          _
        $region20: #{tpu_custom_call.1} parent=11 // pred_fallthru
          _
        // Predicated region
        $region21: #{tpu_custom_call.1} parent=11 // pred_check
          %p288 = pneg %p149
        $region22: #{tpu_custom_call.1} parent=11 // pred_check_branch
          %290 = sbr.rel (%p288) target = $region24
        $region23: #{tpu_custom_call.1} parent=11 // pred_region
          _
        $region24: #{tpu_custom_call.1} parent=11 // pred_fallthru
          _
        // Predicated region
        $region25: #{tpu_custom_call.1} parent=11 // pred_check
          %p291 = pneg %p170
        $region26: #{tpu_custom_call.1} parent=11 // pred_check_branch
          %293 = sbr.rel (%p291) target = $region28
        $region27: #{tpu_custom_call.1} parent=11 // pred_region
          _
        $region28: #{tpu_custom_call.1} parent=11 // pred_fallthru
          _
        // Predicated region
        $region29: #{tpu_custom_call.1} parent=11 // pred_check
          %p294 = pneg %p191
        $region30: #{tpu_custom_call.1} parent=11 // pred_check_branch
          %296 = sbr.rel (%p294) target = $region32
        $region31: #{tpu_custom_call.1} parent=11 // pred_region
          _
        $region32: #{tpu_custom_call.1} parent=11 // pred_fallthru
          _
        // Predicated region
        $region33: #{tpu_custom_call.1} parent=11 // pred_check
          %p297 = pneg %p212
        $region34: #{tpu_custom_call.1} parent=11 // pred_check_branch
          %299 = sbr.rel (%p297) target = $region36
        $region35: #{tpu_custom_call.1} parent=11 // pred_region
          _
        $region36: #{tpu_custom_call.1} parent=11 // pred_fallthru
          _
        // Predicated region
        $region37: #{tpu_custom_call.1} parent=11 // pred_check
          %p300 = pneg %p233
        $region38: #{tpu_custom_call.1} parent=11 // pred_check_branch
          %302 = sbr.rel (%p300) target = $region40
        $region39: #{tpu_custom_call.1} parent=11 // pred_region
          _
        $region40: #{tpu_custom_call.1} parent=11 // pred_fallthru
          _
      $region12: #{tpu_custom_call.1} parent=5 // pred_fallthru
        _
      %p303 = scmp.lt.s32.totalorder %s22, 4
      // Predicated region
      $region41: #{tpu_custom_call.1} parent=5 // pred_check
        %p304 = pneg %p303
      $region42: #{tpu_custom_call.1} parent=5 // pred_check_branch
        %306 = sbr.rel (%p304) target = $region44
      $region43: #{tpu_custom_call.1} parent=5 // pred_region
        // Predicated region
        $region45: #{tpu_custom_call.1} parent=43 // pred_check
          %p307 = pneg %p54
        $region46: #{tpu_custom_call.1} parent=43 // pred_check_branch
          %309 = sbr.rel (%p307) target = $region48
        $region47: #{tpu_custom_call.1} parent=43 // pred_region
          %s310 = sand.u32 %s44, 1
          %s311 = scalar_lea.sflag [#allocation4], %s310
          %s312 = sand.u32 %s44, 1
          %s313 = smul.addr %s312, 8
          %s314 = scalar_lea.vmem [#allocation3], %s313
          %s316 = ssub.s32 128, 128
          %317 = vsyncadd %s311, %s316
          %s318 = smul.addr %s29, 128
          %s319 = scalar_lea.hbm %s0, %s318
          %s321 = sshll.u32 %s314, 4
          %s322 = int_to_ptr.vmem [resolvable:$true] %s321
          %324 = dma.hbm_to_vmem [thread:$0]  %s319, 128, %s322, %s311
        $region48: #{tpu_custom_call.1} parent=43 // pred_fallthru
          _
        // Predicated region
        $region49: #{tpu_custom_call.1} parent=43 // pred_check
          %p325 = pneg %p80
        $region50: #{tpu_custom_call.1} parent=43 // pred_check_branch
          %327 = sbr.rel (%p325) target = $region52
        $region51: #{tpu_custom_call.1} parent=43 // pred_region
          %p328 = scmp.lt.s32.totalorder %s29, 1
          %s329 = scalar_select %p328, %s29, 1
          %s330 = scalar_lea.vmem %s1, %s329
        $region52: #{tpu_custom_call.1} parent=43 // pred_fallthru
          _
      $region44: #{tpu_custom_call.1} parent=5 // pred_fallthru
        _
      %p331 = scmp.le.s32.totalorder 1, %s22
      %p332 = scmp.lt.s32.totalorder %s22, 5
      %p333 = pnand %p331, %p332
      %p334 = pneg %p333
      // Predicated region
      $region53: #{tpu_custom_call.1} parent=5 // pred_check
        _
      $region54: #{tpu_custom_call.1} parent=5 // pred_check_branch
        %336 = sbr.rel (%p333) target = $region56
      $region55: #{tpu_custom_call.1} parent=5 // pred_region
        %s337 = ssub.s32 %s22, 1
        %s338 = sand.u32 %s47, 1
        %s339 = scalar_lea.sflag [#allocation4], %s338
        %s340 = sand.u32 %s47, 1
        %s341 = smul.addr %s340, 8
        %s342 = scalar_lea.vmem [#allocation3], %s341
        // Predicated region
        $region57: #{tpu_custom_call.1} parent=55 // pred_check
          %p343 = pneg %p60
        $region58: #{tpu_custom_call.1} parent=55 // pred_check_branch
          %345 = sbr.rel (%p343) target = $region60
        $region59: #{tpu_custom_call.1} parent=55 // pred_region
          %346 = dma.done %s339, 128
        $region60: #{tpu_custom_call.1} parent=55 // pred_fallthru
          _
        // Predicated region
        $region61: #{tpu_custom_call.1} parent=55 // pred_check
          %p347 = pneg %p107
        $region62: #{tpu_custom_call.1} parent=55 // pred_check_branch
          %349 = sbr.rel (%p347) target = $region64
        $region63: #{tpu_custom_call.1} parent=55 // pred_region
          %350 = dma.done [#allocation7], 128
        $region64: #{tpu_custom_call.1} parent=55 // pred_fallthru
          _
        %s351 = sand.u32 %s47, 1
        %s352 = scalar_lea.sflag [#allocation4], %s351
        %s353 = sand.u32 %s47, 1
        %s354 = smul.addr %s353, 8
        %s355 = scalar_lea.vmem [#allocation3], %s354
        %p356 = pneg %p60
        %p357 = pneg %p57
        %p358 = scmp.lt.s32.totalorder %s31, 1
        %s359 = scalar_select %p358, %s31, 1
        %s360 = scalar_lea.vmem %s1, %s359
        %p361 = pneg %p86
        %p362 = pneg %p83
        %p363 = pneg %p107
        %p364 = pneg %p104
        %p365 = pneg %p128
        %p366 = pneg %p125
        %p367 = pneg %p149
        %p368 = pneg %p146
        %p369 = pneg %p170
        %p370 = pneg %p167
        %p371 = pneg %p191
        %p372 = pneg %p188
        %p373 = pneg %p212
        %p374 = pneg %p209
        %p375 = pneg %p233
        %p376 = pneg %p230
        %p377 = pneg %p259
        %p378 = pneg %p256
        %s379 = sand.u32 %s246, 1
        %s380 = scalar_lea.sflag [#allocation5], %s379
        %s381 = sand.u32 %s246, 1
        %s382 = smul.addr %s381, 8
        %s383 = scalar_lea.vmem [#allocation8], %s382
        %p384 = scmp.lt.s32.totalorder %s31, 1
        %s385 = scalar_select %p384, %s31, 1
        %s386 = scalar_lea.vmem %s1, %s385
        %p387 = scmp.eq.s32.totalorder %s32, 0
        // Predicated region
        $region65: #{tpu_custom_call.1} parent=55 // pred_check
          %p388 = pneg %p387
        $region66: #{tpu_custom_call.1} parent=55 // pred_check_branch
          %390 = sbr.rel (%p388) target = $region68
        $region67: #{tpu_custom_call.1} parent=55 // pred_region
          %v391 = vld [vmem:[%s342] sm:$0xff]
          %v392 = vld [vmem:[#allocation6] sm:$0xff]
          %v393 = vadd.f32 %v391, %v392
          %vm394 = vcmask 261120
          %395 = vst.msk [vmem:[#allocation2] sm:$0xff] %vm394, %v393
        $region68: #{tpu_custom_call.1} parent=55 // pred_fallthru
          _
        %v396 = vld [vmem:[#allocation2] sm:$0xff]
        %v397 = vld [vmem:[%s386] sm:$0x1]
        %s398 = smul.u32 %s32, 8
        %s399 = scalar_lea.vmem %s7, %s398
        %v400 = vld [vmem:[%s399] sm:$0xff]
        %s401 = smul.u32 %s32, 32
        %s402 = scalar_lea.vmem %s3, %s401
        %v403 = vld [vmem:[%s402] sm:$0xff]
        %v404 = vld [vmem:[%s402 + $0x8] sm:$0xff]
        %v405 = vld [vmem:[%s402 + $0x10] sm:$0xff]
        %v406 = vld [vmem:[%s402 + $0x18] sm:$0xff]
        %s407 = scalar_lea.vmem %s4, %s401
        %v408 = vld [vmem:[%s407] sm:$0xff]
        %v409 = vld [vmem:[%s407 + $0x8] sm:$0xff]
        %v410 = vld [vmem:[%s407 + $0x10] sm:$0xff]
        %v411 = vld [vmem:[%s407 + $0x18] sm:$0xff]
        %s412 = scalar_lea.vmem %s5, %s401
        %v413 = vld [vmem:[%s412] sm:$0xff]
        %v414 = vld [vmem:[%s412 + $0x8] sm:$0xff]
        %v415 = vld [vmem:[%s412 + $0x10] sm:$0xff]
        %v416 = vld [vmem:[%s412 + $0x18] sm:$0xff]
        %s417 = smul.u32 %s32, 64
        %s418 = scalar_lea.vmem %s6, %s417
        %v419 = vld [vmem:[%s418] sm:$0xff]
        %v420 = vld [vmem:[%s418 + $0x8] sm:$0xff]
        %v421 = vld [vmem:[%s418 + $0x10] sm:$0xff]
        %v422 = vld [vmem:[%s418 + $0x18] sm:$0xff]
        %v423 = vld [vmem:[%s418 + $0x20] sm:$0xff]
        %v424 = vld [vmem:[%s418 + $0x28] sm:$0xff]
        %v425 = vld [vmem:[%s418 + $0x30] sm:$0xff]
        %v426 = vld [vmem:[%s418 + $0x38] sm:$0xff]
        %vm427 = vcmask 261120
        %v428 = vsel %vm427, %v396, 0.0
        %429 = vadd.xlane.f32.xlu0 %v428
        %v430 = vpop.xlane.xlu0 %429
        %v431 = vrcp.pop 32.0
        %v432 = vmul.f32 %v430, %v431
        %v433 = vsub.f32 %v396, %v432
        %v434 = vmul.f32 %v433, %v433
        %v435 = vsel %vm427, %v434, 0.0
        %436 = vadd.xlane.f32.xlu0 %v435
        %v437 = vpop.xlane.xlu0 %436
        %v438 = vmul.f32 %v437, %v431
        %v439 = vadd.f32 %v438, 1e-05
        %v440 = vrsqrt.pop %v439
        %v441 = vmul.f32 %v433, %v440
        %v442 = vlaneseq
        %v443 = vshrl.u32 %v442, 7
        %v444 = vsub.s32 0, %v443
        %v445 = vrot.slane %v400, %v444
        %v446 = vmul.f32 %v441, %v445
        %v447 = vlaneseq
        %v448 = vshrl.u32 %v447, 7
        %v449 = vsub.s32 1, %v448
        %v450 = vrot.slane %v400, %v449
        %v451 = vadd.f32 %v446, %v450
        %v452 = vlaneseq
        %v453 = vshrl.u32 %v452, 7
        %v454 = vsub.s32 6, %v453
        %v455 = vrot.slane %v400, %v454
        %v457 = vsel %vm427, %v451, 0
        %459 = vmatprep.subr.mxu0 0.0
        %460 = vmatpush1.msra.mxu0 %v403
        %461 = vmatprep.subr.mxu0 0.0
        %462 = vmatpush1.msra.mxu0 %v404
        %463 = vmatprep.subr.mxu0 0.0
        %464 = vmatpush1.msra.mxu0 %v405
        %465 = vmatprep.subr.mxu0 0.0
        %466 = vmatpush1.msra.mxu0 %v406
        %467 = vmatprep.subr.mxu0 0.0
        %468 = vmatpush1.msra.mxu0 0.0
        %469 = vmatprep.subr.mxu0 0.0
        %470 = vmatpush1.msra.mxu0 0.0
        %471 = vmatprep.subr.mxu0 0.0
        %472 = vmatpush1.msra.mxu0 0.0
        %473 = vmatprep.subr.mxu0 0.0
        %474 = vmatpush1.msra.mxu0 0.0
        %475 = vmatprep.subr.mxu0 0.0
        %476 = vmatpush1.msra.mxu0 0.0
        %477 = vmatprep.subr.mxu0 0.0
        %478 = vmatpush1.msra.mxu0 0.0
        %479 = vmatprep.subr.mxu0 0.0
        %480 = vmatpush1.msra.mxu0 0.0
        %481 = vmatprep.subr.mxu0 0.0
        %482 = vmatpush1.msra.mxu0 0.0
        %483 = vmatprep.subr.mxu0 0.0
        %484 = vmatpush1.msra.mxu0 0.0
        %485 = vmatprep.subr.mxu0 0.0
        %486 = vmatpush1.msra.mxu0 0.0
        %487 = vmatprep.subr.mxu0 0.0
        %488 = vmatpush1.msra.mxu0 0.0
        %489 = vmatprep.subr.mxu0 0.0
        %490 = vmatpush1.msra.mxu0 0.0
        %491 = vmatprep.subr.mxu0 0.0
        %492 = vmatpush1.msra.mxu0 0.0
        %493 = vmatprep.subr.mxu0 0.0
        %494 = vmatpush1.msra.mxu0 0.0
        %495 = vmatprep.subr.mxu0 0.0
        %496 = vmatpush1.msra.mxu0 0.0
        %497 = vmatprep.subr.mxu0 0.0
        %498 = vmatpush1.msra.mxu0 0.0
        %499 = vmatprep.subr.mxu0 0.0
        %500 = vmatpush1.msra.mxu0 0.0
        %501 = vmatprep.subr.mxu0 0.0
        %502 = vmatpush1.msra.mxu0 0.0
        %503 = vmatprep.subr.mxu0 0.0
        %504 = vmatpush1.msra.mxu0 0.0
        %505 = vmatprep.subr.mxu0 0.0
        %506 = vmatpush1.msra.mxu0 0.0
        %507 = vmatprep.subr.mxu0 0.0
        %508 = vmatpush1.msra.mxu0 0.0
        %509 = vmatprep.subr.mxu0 0.0
        %510 = vmatpush1.msra.mxu0 0.0
        %511 = vmatprep.subr.mxu0 0.0
        %512 = vmatpush1.msra.mxu0 0.0
        %513 = vmatprep.subr.mxu0 0.0
        %514 = vmatpush1.msra.mxu0 0.0
        %515 = vmatprep.subr.mxu0 0.0
        %516 = vmatpush1.msra.mxu0 0.0
        %517 = vmatprep.subr.mxu0 0.0
        %518 = vmatpush1.msra.mxu0 0.0
        %519 = vmatprep.subr.mxu0 0.0
        %520 = vmatpush1.msra.mxu0 0.0
        %521 = vmatprep.subr.mxu0 0.0
        %522 = vmatpush1.msra.mxu0 0.0
        %523 = vmatprep.mubr.f32.mxu0 0.0
        %524 = vmatmul.mubr.f32.gmra.mrb[0].mxu0 %v457
        %v525 = vpop.f32.mrb[0].mxu0
        %v526 = vadd.f32 %v455, %v525
        %v527 = vpop.f32.mrb[0].mxu0
        %528 = vdwg.mxu0
        %530 = vrot.lane.b32.xlu0 %v526, 120
        %v531 = vpop.permute.xlu0 %530
        %532 = vrot.lane.b32.xlu0 %v526, 112
        %v533 = vpop.permute.xlu0 %532
        %534 = vrot.lane.b32.xlu0 %v526, 104
        %v535 = vpop.permute.xlu0 %534
        %536 = vrot.lane.b32.xlu0 %v526, 96
        %v537 = vpop.permute.xlu0 %536
        %vm538 = vcmask 64512
        %v539 = vsel %vm538, %v526, 0
        %v541 = vsel %vm538, %v537, 0
        %543 = vmatprep.subr.mxu0 0.0
        %544 = vmatpush1.xpose.msra.mxu0 %v541
        %545 = vmatprep.subr.mxu0 0.0
        %546 = vmatpush1.xpose.msra.mxu0 0.0
        %547 = vmatprep.subr.mxu0 0.0
        %548 = vmatpush1.xpose.msra.mxu0 0.0
        %549 = vmatprep.subr.mxu0 0.0
        %550 = vmatpush1.xpose.msra.mxu0 0.0
        %551 = vmatprep.subr.mxu0 0.0
        %552 = vmatpush1.xpose.msra.mxu0 0.0
        %553 = vmatprep.subr.mxu0 0.0
        %554 = vmatpush1.xpose.msra.mxu0 0.0
        %555 = vmatprep.subr.mxu0 0.0
        %556 = vmatpush1.xpose.msra.mxu0 0.0
        %557 = vmatprep.subr.mxu0 0.0
        %558 = vmatpush1.xpose.msra.mxu0 0.0
        %559 = vmatprep.subr.mxu0 0.0
        %560 = vmatpush1.xpose.msra.mxu0 0.0
        %561 = vmatprep.subr.mxu0 0.0
        %562 = vmatpush1.xpose.msra.mxu0 0.0
        %563 = vmatprep.subr.mxu0 0.0
        %564 = vmatpush1.xpose.msra.mxu0 0.0
        %565 = vmatprep.subr.mxu0 0.0
        %566 = vmatpush1.xpose.msra.mxu0 0.0
        %567 = vmatprep.subr.mxu0 0.0
        %568 = vmatpush1.xpose.msra.mxu0 0.0
        %569 = vmatprep.subr.mxu0 0.0
        %570 = vmatpush1.xpose.msra.mxu0 0.0
        %571 = vmatprep.subr.mxu0 0.0
        %572 = vmatpush1.xpose.msra.mxu0 0.0
        %573 = vmatprep.subr.mxu0 0.0
        %574 = vmatpush1.xpose.msra.mxu0 0.0
        %575 = vmatprep.subr.mxu0 0.0
        %576 = vmatpush1.xpose.msra.mxu0 0.0
        %577 = vmatprep.subr.mxu0 0.0
        %578 = vmatpush1.xpose.msra.mxu0 0.0
        %579 = vmatprep.subr.mxu0 0.0
        %580 = vmatpush1.xpose.msra.mxu0 0.0
        %581 = vmatprep.subr.mxu0 0.0
        %582 = vmatpush1.xpose.msra.mxu0 0.0
        %583 = vmatprep.subr.mxu0 0.0
        %584 = vmatpush1.xpose.msra.mxu0 0.0
        %585 = vmatprep.subr.mxu0 0.0
        %586 = vmatpush1.xpose.msra.mxu0 0.0
        %587 = vmatprep.subr.mxu0 0.0
        %588 = vmatpush1.xpose.msra.mxu0 0.0
        %589 = vmatprep.subr.mxu0 0.0
        %590 = vmatpush1.xpose.msra.mxu0 0.0
        %591 = vmatprep.subr.mxu0 0.0
        %592 = vmatpush1.xpose.msra.mxu0 0.0
        %593 = vmatprep.subr.mxu0 0.0
        %594 = vmatpush1.xpose.msra.mxu0 0.0
        %595 = vmatprep.subr.mxu0 0.0
        %596 = vmatpush1.xpose.msra.mxu0 0.0
        %597 = vmatprep.subr.mxu0 0.0
        %598 = vmatpush1.xpose.msra.mxu0 0.0
        %599 = vmatprep.subr.mxu0 0.0
        %600 = vmatpush1.xpose.msra.mxu0 0.0
        %601 = vmatprep.subr.mxu0 0.0
        %602 = vmatpush1.xpose.msra.mxu0 0.0
        %603 = vmatprep.subr.mxu0 0.0
        %604 = vmatpush1.xpose.msra.mxu0 0.0
        %605 = vmatprep.subr.mxu0 0.0
        %606 = vmatpush1.xpose.msra.mxu0 0.0
        %607 = vmatprep.mubr.f32.mxu0 0.0
        %608 = vmatmul.mubr.f32.gmra.mrb[0].mxu0 %v539
        %v609 = vpop.f32.mrb[0].mxu0
        %v610 = vadd.f32 0.0, %v609
        %v611 = vpop.f32.mrb[0].mxu0
        %612 = vdwg.mxu0
        %613 = vrot.lane.b32.xlu0 %v531, 96
        %v614 = vpop.permute.xlu0 %613
        %v615 = vsel %vm538, %v531, 0
        %v617 = vsel %vm538, %v614, 0
        %619 = vmatprep.subr.mxu0 0.0
        %620 = vmatpush1.xpose.msra.mxu0 %v617
        %621 = vmatprep.subr.mxu0 0.0
        %622 = vmatpush1.xpose.msra.mxu0 0.0
        %623 = vmatprep.subr.mxu0 0.0
        %624 = vmatpush1.xpose.msra.mxu0 0.0
        %625 = vmatprep.subr.mxu0 0.0
        %626 = vmatpush1.xpose.msra.mxu0 0.0
        %627 = vmatprep.subr.mxu0 0.0
        %628 = vmatpush1.xpose.msra.mxu0 0.0
        %629 = vmatprep.subr.mxu0 0.0
        %630 = vmatpush1.xpose.msra.mxu0 0.0
        %631 = vmatprep.subr.mxu0 0.0
        %632 = vmatpush1.xpose.msra.mxu0 0.0
        %633 = vmatprep.subr.mxu0 0.0
        %634 = vmatpush1.xpose.msra.mxu0 0.0
        %635 = vmatprep.subr.mxu0 0.0
        %636 = vmatpush1.xpose.msra.mxu0 0.0
        %637 = vmatprep.subr.mxu0 0.0
        %638 = vmatpush1.xpose.msra.mxu0 0.0
        %639 = vmatprep.subr.mxu0 0.0
        %640 = vmatpush1.xpose.msra.mxu0 0.0
        %641 = vmatprep.subr.mxu0 0.0
        %642 = vmatpush1.xpose.msra.mxu0 0.0
        %643 = vmatprep.subr.mxu0 0.0
        %644 = vmatpush1.xpose.msra.mxu0 0.0
        %645 = vmatprep.subr.mxu0 0.0
        %646 = vmatpush1.xpose.msra.mxu0 0.0
        %647 = vmatprep.subr.mxu0 0.0
        %648 = vmatpush1.xpose.msra.mxu0 0.0
        %649 = vmatprep.subr.mxu0 0.0
        %650 = vmatpush1.xpose.msra.mxu0 0.0
        %651 = vmatprep.subr.mxu0 0.0
        %652 = vmatpush1.xpose.msra.mxu0 0.0
        %653 = vmatprep.subr.mxu0 0.0
        %654 = vmatpush1.xpose.msra.mxu0 0.0
        %655 = vmatprep.subr.mxu0 0.0
        %656 = vmatpush1.xpose.msra.mxu0 0.0
        %657 = vmatprep.subr.mxu0 0.0
        %658 = vmatpush1.xpose.msra.mxu0 0.0
        %659 = vmatprep.subr.mxu0 0.0
        %660 = vmatpush1.xpose.msra.mxu0 0.0
        %661 = vmatprep.subr.mxu0 0.0
        %662 = vmatpush1.xpose.msra.mxu0 0.0
        %663 = vmatprep.subr.mxu0 0.0
        %664 = vmatpush1.xpose.msra.mxu0 0.0
        %665 = vmatprep.subr.mxu0 0.0
        %666 = vmatpush1.xpose.msra.mxu0 0.0
        %667 = vmatprep.subr.mxu0 0.0
        %668 = vmatpush1.xpose.msra.mxu0 0.0
        %669 = vmatprep.subr.mxu0 0.0
        %670 = vmatpush1.xpose.msra.mxu0 0.0
        %671 = vmatprep.subr.mxu0 0.0
        %672 = vmatpush1.xpose.msra.mxu0 0.0
        %673 = vmatprep.subr.mxu0 0.0
        %674 = vmatpush1.xpose.msra.mxu0 0.0
        %675 = vmatprep.subr.mxu0 0.0
        %676 = vmatpush1.xpose.msra.mxu0 0.0
        %677 = vmatprep.subr.mxu0 0.0
        %678 = vmatpush1.xpose.msra.mxu0 0.0
        %679 = vmatprep.subr.mxu0 0.0
        %680 = vmatpush1.xpose.msra.mxu0 0.0
        %681 = vmatprep.subr.mxu0 0.0
        %682 = vmatpush1.xpose.msra.mxu0 0.0
        %683 = vmatprep.mubr.f32.mxu0 0.0
        %684 = vmatmul.mubr.f32.gmra.mrb[0].mxu0 %v615
        %v685 = vpop.f32.mrb[0].mxu0
        %v686 = vadd.f32 0.0, %v685
        %v687 = vpop.f32.mrb[0].mxu0
        %688 = vdwg.mxu0
        %689 = vrot.lane.b32.xlu0 %v533, 96
        %v690 = vpop.permute.xlu0 %689
        %v691 = vsel %vm538, %v533, 0
        %v693 = vsel %vm538, %v690, 0
        %695 = vmatprep.subr.mxu0 0.0
        %696 = vmatpush1.xpose.msra.mxu0 %v693
        %697 = vmatprep.subr.mxu0 0.0
        %698 = vmatpush1.xpose.msra.mxu0 0.0
        %699 = vmatprep.subr.mxu0 0.0
        %700 = vmatpush1.xpose.msra.mxu0 0.0
        %701 = vmatprep.subr.mxu0 0.0
        %702 = vmatpush1.xpose.msra.mxu0 0.0
        %703 = vmatprep.subr.mxu0 0.0
        %704 = vmatpush1.xpose.msra.mxu0 0.0
        %705 = vmatprep.subr.mxu0 0.0
        %706 = vmatpush1.xpose.msra.mxu0 0.0
        %707 = vmatprep.subr.mxu0 0.0
        %708 = vmatpush1.xpose.msra.mxu0 0.0
        %709 = vmatprep.subr.mxu0 0.0
        %710 = vmatpush1.xpose.msra.mxu0 0.0
        %711 = vmatprep.subr.mxu0 0.0
        %712 = vmatpush1.xpose.msra.mxu0 0.0
        %713 = vmatprep.subr.mxu0 0.0
        %714 = vmatpush1.xpose.msra.mxu0 0.0
        %715 = vmatprep.subr.mxu0 0.0
        %716 = vmatpush1.xpose.msra.mxu0 0.0
        %717 = vmatprep.subr.mxu0 0.0
        %718 = vmatpush1.xpose.msra.mxu0 0.0
        %719 = vmatprep.subr.mxu0 0.0
        %720 = vmatpush1.xpose.msra.mxu0 0.0
        %721 = vmatprep.subr.mxu0 0.0
        %722 = vmatpush1.xpose.msra.mxu0 0.0
        %723 = vmatprep.subr.mxu0 0.0
        %724 = vmatpush1.xpose.msra.mxu0 0.0
        %725 = vmatprep.subr.mxu0 0.0
        %726 = vmatpush1.xpose.msra.mxu0 0.0
        %727 = vmatprep.subr.mxu0 0.0
        %728 = vmatpush1.xpose.msra.mxu0 0.0
        %729 = vmatprep.subr.mxu0 0.0
        %730 = vmatpush1.xpose.msra.mxu0 0.0
        %731 = vmatprep.subr.mxu0 0.0
        %732 = vmatpush1.xpose.msra.mxu0 0.0
        %733 = vmatprep.subr.mxu0 0.0
        %734 = vmatpush1.xpose.msra.mxu0 0.0
        %735 = vmatprep.subr.mxu0 0.0
        %736 = vmatpush1.xpose.msra.mxu0 0.0
        %737 = vmatprep.subr.mxu0 0.0
        %738 = vmatpush1.xpose.msra.mxu0 0.0
        %739 = vmatprep.subr.mxu0 0.0
        %740 = vmatpush1.xpose.msra.mxu0 0.0
        %741 = vmatprep.subr.mxu0 0.0
        %742 = vmatpush1.xpose.msra.mxu0 0.0
        %743 = vmatprep.subr.mxu0 0.0
        %744 = vmatpush1.xpose.msra.mxu0 0.0
        %745 = vmatprep.subr.mxu0 0.0
        %746 = vmatpush1.xpose.msra.mxu0 0.0
        %747 = vmatprep.subr.mxu0 0.0
        %748 = vmatpush1.xpose.msra.mxu0 0.0
        %749 = vmatprep.subr.mxu0 0.0
        %750 = vmatpush1.xpose.msra.mxu0 0.0
        %751 = vmatprep.subr.mxu0 0.0
        %752 = vmatpush1.xpose.msra.mxu0 0.0
        %753 = vmatprep.subr.mxu0 0.0
        %754 = vmatpush1.xpose.msra.mxu0 0.0
        %755 = vmatprep.subr.mxu0 0.0
        %756 = vmatpush1.xpose.msra.mxu0 0.0
        %757 = vmatprep.subr.mxu0 0.0
        %758 = vmatpush1.xpose.msra.mxu0 0.0
        %759 = vmatprep.mubr.f32.mxu0 0.0
        %760 = vmatmul.mubr.f32.gmra.mrb[0].mxu0 %v691
        %v761 = vpop.f32.mrb[0].mxu0
        %v762 = vadd.f32 0.0, %v761
        %v763 = vpop.f32.mrb[0].mxu0
        %764 = vdwg.mxu0
        %765 = vrot.lane.b32.xlu0 %v535, 96
        %v766 = vpop.permute.xlu0 %765
        %v767 = vsel %vm538, %v535, 0
        %v769 = vsel %vm538, %v766, 0
        %771 = vmatprep.subr.mxu0 0.0
        %772 = vmatpush1.xpose.msra.mxu0 %v769
        %773 = vmatprep.subr.mxu0 0.0
        %774 = vmatpush1.xpose.msra.mxu0 0.0
        %775 = vmatprep.subr.mxu0 0.0
        %776 = vmatpush1.xpose.msra.mxu0 0.0
        %777 = vmatprep.subr.mxu0 0.0
        %778 = vmatpush1.xpose.msra.mxu0 0.0
        %779 = vmatprep.subr.mxu0 0.0
        %780 = vmatpush1.xpose.msra.mxu0 0.0
        %781 = vmatprep.subr.mxu0 0.0
        %782 = vmatpush1.xpose.msra.mxu0 0.0
        %783 = vmatprep.subr.mxu0 0.0
        %784 = vmatpush1.xpose.msra.mxu0 0.0
        %785 = vmatprep.subr.mxu0 0.0
        %786 = vmatpush1.xpose.msra.mxu0 0.0
        %787 = vmatprep.subr.mxu0 0.0
        %788 = vmatpush1.xpose.msra.mxu0 0.0
        %789 = vmatprep.subr.mxu0 0.0
        %790 = vmatpush1.xpose.msra.mxu0 0.0
        %791 = vmatprep.subr.mxu0 0.0
        %792 = vmatpush1.xpose.msra.mxu0 0.0
        %793 = vmatprep.subr.mxu0 0.0
        %794 = vmatpush1.xpose.msra.mxu0 0.0
        %795 = vmatprep.subr.mxu0 0.0
        %796 = vmatpush1.xpose.msra.mxu0 0.0
        %797 = vmatprep.subr.mxu0 0.0
        %798 = vmatpush1.xpose.msra.mxu0 0.0
        %799 = vmatprep.subr.mxu0 0.0
        %800 = vmatpush1.xpose.msra.mxu0 0.0
        %801 = vmatprep.subr.mxu0 0.0
        %802 = vmatpush1.xpose.msra.mxu0 0.0
        %803 = vmatprep.subr.mxu0 0.0
        %804 = vmatpush1.xpose.msra.mxu0 0.0
        %805 = vmatprep.subr.mxu0 0.0
        %806 = vmatpush1.xpose.msra.mxu0 0.0
        %807 = vmatprep.subr.mxu0 0.0
        %808 = vmatpush1.xpose.msra.mxu0 0.0
        %809 = vmatprep.subr.mxu0 0.0
        %810 = vmatpush1.xpose.msra.mxu0 0.0
        %811 = vmatprep.subr.mxu0 0.0
        %812 = vmatpush1.xpose.msra.mxu0 0.0
        %813 = vmatprep.subr.mxu0 0.0
        %814 = vmatpush1.xpose.msra.mxu0 0.0
        %815 = vmatprep.subr.mxu0 0.0
        %816 = vmatpush1.xpose.msra.mxu0 0.0
        %817 = vmatprep.subr.mxu0 0.0
        %818 = vmatpush1.xpose.msra.mxu0 0.0
        %819 = vmatprep.subr.mxu0 0.0
        %820 = vmatpush1.xpose.msra.mxu0 0.0
        %821 = vmatprep.subr.mxu0 0.0
        %822 = vmatpush1.xpose.msra.mxu0 0.0
        %823 = vmatprep.subr.mxu0 0.0
        %824 = vmatpush1.xpose.msra.mxu0 0.0
        %825 = vmatprep.subr.mxu0 0.0
        %826 = vmatpush1.xpose.msra.mxu0 0.0
        %827 = vmatprep.subr.mxu0 0.0
        %828 = vmatpush1.xpose.msra.mxu0 0.0
        %829 = vmatprep.subr.mxu0 0.0
        %830 = vmatpush1.xpose.msra.mxu0 0.0
        %831 = vmatprep.subr.mxu0 0.0
        %832 = vmatpush1.xpose.msra.mxu0 0.0
        %833 = vmatprep.subr.mxu0 0.0
        %834 = vmatpush1.xpose.msra.mxu0 0.0
        %835 = vmatprep.mubr.f32.mxu0 0.0
        %836 = vmatmul.mubr.f32.gmra.mrb[0].mxu0 %v767
        %v837 = vpop.f32.mrb[0].mxu0
        %v838 = vadd.f32 0.0, %v837
        %v839 = vpop.f32.mrb[0].mxu0
        %840 = vdwg.mxu0
        %v841 = vmul.f32 %v610, 0.35355338
        %v842 = vmul.f32 %v686, 0.35355338
        %v843 = vmul.f32 %v762, 0.35355338
        %v844 = vmul.f32 %v838, 0.35355338
        %v846 = vlaneseq
        %v847 = vshrl.u32 %v846, 7
        %v848 = vsub.s32 0, %v847
        %v849 = vrot.slane %v397, %v848
        %v851 = vadd.f32 %v841, %v849
        %v852 = vadd.f32 %v842, %v849
        %v853 = vadd.f32 %v843, %v849
        %v854 = vadd.f32 %v844, %v849
        %v855 = vsel %vm538, %v851, -inf
        %856 = vmax.xlane.f32.xlu0 %v855
        %v857 = vpop.xlane.xlu0 %856
        %v858 = vsel %vm538, %v852, -inf
        %859 = vmax.xlane.f32.xlu0 %v858
        %v860 = vpop.xlane.xlu0 %859
        %v861 = vsel %vm538, %v853, -inf
        %862 = vmax.xlane.f32.xlu0 %v861
        %v863 = vpop.xlane.xlu0 %862
        %v864 = vsel %vm538, %v854, -inf
        %865 = vmax.xlane.f32.xlu0 %v864
        %v866 = vpop.xlane.xlu0 %865
        %v867 = vsub.f32 %v851, %v857
        %v868 = vsub.f32 %v852, %v860
        %v869 = vsub.f32 %v853, %v863
        %v870 = vsub.f32 %v854, %v866
        %v871 = vmul.f32 %v867, 1.442695
        %v872 = vpow.pop %v871
        %v873 = vmul.f32 %v868, 1.442695
        %v874 = vpow.pop %v873
        %v875 = vmul.f32 %v869, 1.442695
        %v876 = vpow.pop %v875
        %v877 = vmul.f32 %v870, 1.442695
        %v878 = vpow.pop %v877
        %v879 = vsel %vm538, %v872, 0.0
        %880 = vadd.xlane.f32.xlu0 %v879
        %v881 = vpop.xlane.xlu0 %880
        %v882 = vsel %vm538, %v874, 0.0
        %883 = vadd.xlane.f32.xlu0 %v882
        %v884 = vpop.xlane.xlu0 %883
        %v885 = vsel %vm538, %v876, 0.0
        %886 = vadd.xlane.f32.xlu0 %v885
        %v887 = vpop.xlane.xlu0 %886
        %v888 = vsel %vm538, %v878, 0.0
        %889 = vadd.xlane.f32.xlu0 %v888
        %v890 = vpop.xlane.xlu0 %889
        %v891 = vrcp.pop %v881
        %v892 = vrcp.pop %v884
        %v893 = vrcp.pop %v887
        %v894 = vrcp.pop %v890
        %v895 = vmul.f32 %v872, %v891
        %v896 = vmul.f32 %v874, %v892
        %v897 = vmul.f32 %v876, %v893
        %v898 = vmul.f32 %v878, %v894
        %899 = vrot.lane.b32.xlu0 %v526, 64
        %v900 = vpop.permute.xlu0 %899
        %v903 = vsel %vm538, %v895, 0
        %905 = vmatprep.subr.mxu0 0.0
        %906 = vmatpush1.msra.mxu0 %v900
        %907 = vmatprep.subr.mxu0 0.0
        %908 = vmatpush1.msra.mxu0 0.0
        %909 = vmatprep.subr.mxu0 0.0
        %910 = vmatpush1.msra.mxu0 0.0
        %911 = vmatprep.subr.mxu0 0.0
        %912 = vmatpush1.msra.mxu0 0.0
        %913 = vmatprep.subr.mxu0 0.0
        %914 = vmatpush1.msra.mxu0 0.0
        %915 = vmatprep.subr.mxu0 0.0
        %916 = vmatpush1.msra.mxu0 0.0
        %917 = vmatprep.subr.mxu0 0.0
        %918 = vmatpush1.msra.mxu0 0.0
        %919 = vmatprep.subr.mxu0 0.0
        %920 = vmatpush1.msra.mxu0 0.0
        %921 = vmatprep.subr.mxu0 0.0
        %922 = vmatpush1.msra.mxu0 0.0
        %923 = vmatprep.subr.mxu0 0.0
        %924 = vmatpush1.msra.mxu0 0.0
        %925 = vmatprep.subr.mxu0 0.0
        %926 = vmatpush1.msra.mxu0 0.0
        %927 = vmatprep.subr.mxu0 0.0
        %928 = vmatpush1.msra.mxu0 0.0
        %929 = vmatprep.subr.mxu0 0.0
        %930 = vmatpush1.msra.mxu0 0.0
        %931 = vmatprep.subr.mxu0 0.0
        %932 = vmatpush1.msra.mxu0 0.0
        %933 = vmatprep.subr.mxu0 0.0
        %934 = vmatpush1.msra.mxu0 0.0
        %935 = vmatprep.subr.mxu0 0.0
        %936 = vmatpush1.msra.mxu0 0.0
        %937 = vmatprep.subr.mxu0 0.0
        %938 = vmatpush1.msra.mxu0 0.0
        %939 = vmatprep.subr.mxu0 0.0
        %940 = vmatpush1.msra.mxu0 0.0
        %941 = vmatprep.subr.mxu0 0.0
        %942 = vmatpush1.msra.mxu0 0.0
        %943 = vmatprep.subr.mxu0 0.0
        %944 = vmatpush1.msra.mxu0 0.0
        %945 = vmatprep.subr.mxu0 0.0
        %946 = vmatpush1.msra.mxu0 0.0
        %947 = vmatprep.subr.mxu0 0.0
        %948 = vmatpush1.msra.mxu0 0.0
        %949 = vmatprep.subr.mxu0 0.0
        %950 = vmatpush1.msra.mxu0 0.0
        %951 = vmatprep.subr.mxu0 0.0
        %952 = vmatpush1.msra.mxu0 0.0
        %953 = vmatprep.subr.mxu0 0.0
        %954 = vmatpush1.msra.mxu0 0.0
        %955 = vmatprep.subr.mxu0 0.0
        %956 = vmatpush1.msra.mxu0 0.0
        %957 = vmatprep.subr.mxu0 0.0
        %958 = vmatpush1.msra.mxu0 0.0
        %959 = vmatprep.subr.mxu0 0.0
        %960 = vmatpush1.msra.mxu0 0.0
        %961 = vmatprep.subr.mxu0 0.0
        %962 = vmatpush1.msra.mxu0 0.0
        %963 = vmatprep.subr.mxu0 0.0
        %964 = vmatpush1.msra.mxu0 0.0
        %965 = vmatprep.subr.mxu0 0.0
        %966 = vmatpush1.msra.mxu0 0.0
        %967 = vmatprep.subr.mxu0 0.0
        %968 = vmatpush1.msra.mxu0 0.0
        %969 = vmatprep.mubr.f32.mxu0 0.0
        %970 = vmatmul.mubr.f32.gmra.mrb[0].mxu0 %v903
        %v971 = vpop.f32.mrb[0].mxu0
        %v972 = vadd.f32 0.0, %v971
        %v973 = vpop.f32.mrb[0].mxu0
        %974 = vdwg.mxu0
        %975 = vrot.lane.b32.xlu0 %v531, 64
        %v976 = vpop.permute.xlu0 %975
        %v979 = vsel %vm538, %v896, 0
        %981 = vmatprep.subr.mxu0 0.0
        %982 = vmatpush1.msra.mxu0 %v976
        %983 = vmatprep.subr.mxu0 0.0
        %984 = vmatpush1.msra.mxu0 0.0
        %985 = vmatprep.subr.mxu0 0.0
        %986 = vmatpush1.msra.mxu0 0.0
        %987 = vmatprep.subr.mxu0 0.0
        %988 = vmatpush1.msra.mxu0 0.0
        %989 = vmatprep.subr.mxu0 0.0
        %990 = vmatpush1.msra.mxu0 0.0
        %991 = vmatprep.subr.mxu0 0.0
        %992 = vmatpush1.msra.mxu0 0.0
        %993 = vmatprep.subr.mxu0 0.0
        %994 = vmatpush1.msra.mxu0 0.0
        %995 = vmatprep.subr.mxu0 0.0
        %996 = vmatpush1.msra.mxu0 0.0
        %997 = vmatprep.subr.mxu0 0.0
        %998 = vmatpush1.msra.mxu0 0.0
        %999 = vmatprep.subr.mxu0 0.0
        %1000 = vmatpush1.msra.mxu0 0.0
        %1001 = vmatprep.subr.mxu0 0.0
        %1002 = vmatpush1.msra.mxu0 0.0
        %1003 = vmatprep.subr.mxu0 0.0
        %1004 = vmatpush1.msra.mxu0 0.0
        %1005 = vmatprep.subr.mxu0 0.0
        %1006 = vmatpush1.msra.mxu0 0.0
        %1007 = vmatprep.subr.mxu0 0.0
        %1008 = vmatpush1.msra.mxu0 0.0
        %1009 = vmatprep.subr.mxu0 0.0
        %1010 = vmatpush1.msra.mxu0 0.0
        %1011 = vmatprep.subr.mxu0 0.0
        %1012 = vmatpush1.msra.mxu0 0.0
        %1013 = vmatprep.subr.mxu0 0.0
        %1014 = vmatpush1.msra.mxu0 0.0
        %1015 = vmatprep.subr.mxu0 0.0
        %1016 = vmatpush1.msra.mxu0 0.0
        %1017 = vmatprep.subr.mxu0 0.0
        %1018 = vmatpush1.msra.mxu0 0.0
        %1019 = vmatprep.subr.mxu0 0.0
        %1020 = vmatpush1.msra.mxu0 0.0
        %1021 = vmatprep.subr.mxu0 0.0
        %1022 = vmatpush1.msra.mxu0 0.0
        %1023 = vmatprep.subr.mxu0 0.0
        %1024 = vmatpush1.msra.mxu0 0.0
        %1025 = vmatprep.subr.mxu0 0.0
        %1026 = vmatpush1.msra.mxu0 0.0
        %1027 = vmatprep.subr.mxu0 0.0
        %1028 = vmatpush1.msra.mxu0 0.0
        %1029 = vmatprep.subr.mxu0 0.0
        %1030 = vmatpush1.msra.mxu0 0.0
        %1031 = vmatprep.subr.mxu0 0.0
        %1032 = vmatpush1.msra.mxu0 0.0
        %1033 = vmatprep.subr.mxu0 0.0
        %1034 = vmatpush1.msra.mxu0 0.0
        %1035 = vmatprep.subr.mxu0 0.0
        %1036 = vmatpush1.msra.mxu0 0.0
        %1037 = vmatprep.subr.mxu0 0.0
        %1038 = vmatpush1.msra.mxu0 0.0
        %1039 = vmatprep.subr.mxu0 0.0
        %1040 = vmatpush1.msra.mxu0 0.0
        %1041 = vmatprep.subr.mxu0 0.0
        %1042 = vmatpush1.msra.mxu0 0.0
        %1043 = vmatprep.subr.mxu0 0.0
        %1044 = vmatpush1.msra.mxu0 0.0
        %1045 = vmatprep.mubr.f32.mxu0 0.0
        %1046 = vmatmul.mubr.f32.gmra.mrb[0].mxu0 %v979
        %v1047 = vpop.f32.mrb[0].mxu0
        %v1048 = vadd.f32 0.0, %v1047
        %v1049 = vpop.f32.mrb[0].mxu0
        %1050 = vdwg.mxu0
        %1051 = vrot.lane.b32.xlu0 %v533, 64
        %v1052 = vpop.permute.xlu0 %1051
        %v1055 = vsel %vm538, %v897, 0
        %1057 = vmatprep.subr.mxu0 0.0
        %1058 = vmatpush1.msra.mxu0 %v1052
        %1059 = vmatprep.subr.mxu0 0.0
        %1060 = vmatpush1.msra.mxu0 0.0
        %1061 = vmatprep.subr.mxu0 0.0
        %1062 = vmatpush1.msra.mxu0 0.0
        %1063 = vmatprep.subr.mxu0 0.0
        %1064 = vmatpush1.msra.mxu0 0.0
        %1065 = vmatprep.subr.mxu0 0.0
        %1066 = vmatpush1.msra.mxu0 0.0
        %1067 = vmatprep.subr.mxu0 0.0
        %1068 = vmatpush1.msra.mxu0 0.0
        %1069 = vmatprep.subr.mxu0 0.0
        %1070 = vmatpush1.msra.mxu0 0.0
        %1071 = vmatprep.subr.mxu0 0.0
        %1072 = vmatpush1.msra.mxu0 0.0
        %1073 = vmatprep.subr.mxu0 0.0
        %1074 = vmatpush1.msra.mxu0 0.0
        %1075 = vmatprep.subr.mxu0 0.0
        %1076 = vmatpush1.msra.mxu0 0.0
        %1077 = vmatprep.subr.mxu0 0.0
        %1078 = vmatpush1.msra.mxu0 0.0
        %1079 = vmatprep.subr.mxu0 0.0
        %1080 = vmatpush1.msra.mxu0 0.0
        %1081 = vmatprep.subr.mxu0 0.0
        %1082 = vmatpush1.msra.mxu0 0.0
        %1083 = vmatprep.subr.mxu0 0.0
        %1084 = vmatpush1.msra.mxu0 0.0
        %1085 = vmatprep.subr.mxu0 0.0
        %1086 = vmatpush1.msra.mxu0 0.0
        %1087 = vmatprep.subr.mxu0 0.0
        %1088 = vmatpush1.msra.mxu0 0.0
        %1089 = vmatprep.subr.mxu0 0.0
        %1090 = vmatpush1.msra.mxu0 0.0
        %1091 = vmatprep.subr.mxu0 0.0
        %1092 = vmatpush1.msra.mxu0 0.0
        %1093 = vmatprep.subr.mxu0 0.0
        %1094 = vmatpush1.msra.mxu0 0.0
        %1095 = vmatprep.subr.mxu0 0.0
        %1096 = vmatpush1.msra.mxu0 0.0
        %1097 = vmatprep.subr.mxu0 0.0
        %1098 = vmatpush1.msra.mxu0 0.0
        %1099 = vmatprep.subr.mxu0 0.0
        %1100 = vmatpush1.msra.mxu0 0.0
        %1101 = vmatprep.subr.mxu0 0.0
        %1102 = vmatpush1.msra.mxu0 0.0
        %1103 = vmatprep.subr.mxu0 0.0
        %1104 = vmatpush1.msra.mxu0 0.0
        %1105 = vmatprep.subr.mxu0 0.0
        %1106 = vmatpush1.msra.mxu0 0.0
        %1107 = vmatprep.subr.mxu0 0.0
        %1108 = vmatpush1.msra.mxu0 0.0
        %1109 = vmatprep.subr.mxu0 0.0
        %1110 = vmatpush1.msra.mxu0 0.0
        %1111 = vmatprep.subr.mxu0 0.0
        %1112 = vmatpush1.msra.mxu0 0.0
        %1113 = vmatprep.subr.mxu0 0.0
        %1114 = vmatpush1.msra.mxu0 0.0
        %1115 = vmatprep.subr.mxu0 0.0
        %1116 = vmatpush1.msra.mxu0 0.0
        %1117 = vmatprep.subr.mxu0 0.0
        %1118 = vmatpush1.msra.mxu0 0.0
        %1119 = vmatprep.subr.mxu0 0.0
        %1120 = vmatpush1.msra.mxu0 0.0
        %1121 = vmatprep.mubr.f32.mxu0 0.0
        %1122 = vmatmul.mubr.f32.gmra.mrb[0].mxu0 %v1055
        %v1123 = vpop.f32.mrb[0].mxu0
        %v1124 = vadd.f32 0.0, %v1123
        %v1125 = vpop.f32.mrb[0].mxu0
        %1126 = vdwg.mxu0
        %1127 = vrot.lane.b32.xlu0 %v535, 64
        %v1128 = vpop.permute.xlu0 %1127
        %v1131 = vsel %vm538, %v898, 0
        %1133 = vmatprep.subr.mxu0 0.0
        %1134 = vmatpush1.msra.mxu0 %v1128
        %1135 = vmatprep.subr.mxu0 0.0
        %1136 = vmatpush1.msra.mxu0 0.0
        %1137 = vmatprep.subr.mxu0 0.0
        %1138 = vmatpush1.msra.mxu0 0.0
        %1139 = vmatprep.subr.mxu0 0.0
        %1140 = vmatpush1.msra.mxu0 0.0
        %1141 = vmatprep.subr.mxu0 0.0
        %1142 = vmatpush1.msra.mxu0 0.0
        %1143 = vmatprep.subr.mxu0 0.0
        %1144 = vmatpush1.msra.mxu0 0.0
        %1145 = vmatprep.subr.mxu0 0.0
        %1146 = vmatpush1.msra.mxu0 0.0
        %1147 = vmatprep.subr.mxu0 0.0
        %1148 = vmatpush1.msra.mxu0 0.0
        %1149 = vmatprep.subr.mxu0 0.0
        %1150 = vmatpush1.msra.mxu0 0.0
        %1151 = vmatprep.subr.mxu0 0.0
        %1152 = vmatpush1.msra.mxu0 0.0
        %1153 = vmatprep.subr.mxu0 0.0
        %1154 = vmatpush1.msra.mxu0 0.0
        %1155 = vmatprep.subr.mxu0 0.0
        %1156 = vmatpush1.msra.mxu0 0.0
        %1157 = vmatprep.subr.mxu0 0.0
        %1158 = vmatpush1.msra.mxu0 0.0
        %1159 = vmatprep.subr.mxu0 0.0
        %1160 = vmatpush1.msra.mxu0 0.0
        %1161 = vmatprep.subr.mxu0 0.0
        %1162 = vmatpush1.msra.mxu0 0.0
        %1163 = vmatprep.subr.mxu0 0.0
        %1164 = vmatpush1.msra.mxu0 0.0
        %1165 = vmatprep.subr.mxu0 0.0
        %1166 = vmatpush1.msra.mxu0 0.0
        %1167 = vmatprep.subr.mxu0 0.0
        %1168 = vmatpush1.msra.mxu0 0.0
        %1169 = vmatprep.subr.mxu0 0.0
        %1170 = vmatpush1.msra.mxu0 0.0
        %1171 = vmatprep.subr.mxu0 0.0
        %1172 = vmatpush1.msra.mxu0 0.0
        %1173 = vmatprep.subr.mxu0 0.0
        %1174 = vmatpush1.msra.mxu0 0.0
        %1175 = vmatprep.subr.mxu0 0.0
        %1176 = vmatpush1.msra.mxu0 0.0
        %1177 = vmatprep.subr.mxu0 0.0
        %1178 = vmatpush1.msra.mxu0 0.0
        %1179 = vmatprep.subr.mxu0 0.0
        %1180 = vmatpush1.msra.mxu0 0.0
        %1181 = vmatprep.subr.mxu0 0.0
        %1182 = vmatpush1.msra.mxu0 0.0
        %1183 = vmatprep.subr.mxu0 0.0
        %1184 = vmatpush1.msra.mxu0 0.0
        %1185 = vmatprep.subr.mxu0 0.0
        %1186 = vmatpush1.msra.mxu0 0.0
        %1187 = vmatprep.subr.mxu0 0.0
        %1188 = vmatpush1.msra.mxu0 0.0
        %1189 = vmatprep.subr.mxu0 0.0
        %1190 = vmatpush1.msra.mxu0 0.0
        %1191 = vmatprep.subr.mxu0 0.0
        %1192 = vmatpush1.msra.mxu0 0.0
        %1193 = vmatprep.subr.mxu0 0.0
        %1194 = vmatpush1.msra.mxu0 0.0
        %1195 = vmatprep.subr.mxu0 0.0
        %1196 = vmatpush1.msra.mxu0 0.0
        %1197 = vmatprep.mubr.f32.mxu0 0.0
        %1198 = vmatmul.mubr.f32.gmra.mrb[0].mxu0 %v1131
        %v1199 = vpop.f32.mrb[0].mxu0
        %v1200 = vadd.f32 0.0, %v1199
        %v1201 = vpop.f32.mrb[0].mxu0
        %1202 = vdwg.mxu0
        %1204 = vrot.lane.b32.xlu0 %v1048, 8
        %v1205 = vpop.permute.xlu0 %1204
        %1208 = vrot.lane.b32.xlu0 %v1124, 16
        %v1209 = vpop.permute.xlu0 %1208
        %1212 = vrot.lane.b32.xlu0 %v1200, 24
        %v1213 = vpop.permute.xlu0 %1212
        %v1215 = vsel %vm538, %v972, %v1205
        %vm1216 = vcmask 130048
        %v1217 = vsel %vm1216, %v1215, %v1209
        %vm1218 = vcmask 195584
        %v1219 = vsel %vm1218, %v1217, %v1213
        %v1220 = vlaneseq
        %v1221 = vshrl.u32 %v1220, 7
        %v1222 = vsub.s32 4, %v1221
        %v1223 = vrot.slane %v400, %v1222
        %v1225 = vsel %vm427, %v1219, 0
        %1227 = vmatprep.subr.mxu0 0.0
        %1228 = vmatpush1.msra.mxu0 %v408
        %1229 = vmatprep.subr.mxu0 0.0
        %1230 = vmatpush1.msra.mxu0 %v409
        %1231 = vmatprep.subr.mxu0 0.0
        %1232 = vmatpush1.msra.mxu0 %v410
        %1233 = vmatprep.subr.mxu0 0.0
        %1234 = vmatpush1.msra.mxu0 %v411
        %1235 = vmatprep.subr.mxu0 0.0
        %1236 = vmatpush1.msra.mxu0 0.0
        %1237 = vmatprep.subr.mxu0 0.0
        %1238 = vmatpush1.msra.mxu0 0.0
        %1239 = vmatprep.subr.mxu0 0.0
        %1240 = vmatpush1.msra.mxu0 0.0
        %1241 = vmatprep.subr.mxu0 0.0
        %1242 = vmatpush1.msra.mxu0 0.0
        %1243 = vmatprep.subr.mxu0 0.0
        %1244 = vmatpush1.msra.mxu0 0.0
        %1245 = vmatprep.subr.mxu0 0.0
        %1246 = vmatpush1.msra.mxu0 0.0
        %1247 = vmatprep.subr.mxu0 0.0
        %1248 = vmatpush1.msra.mxu0 0.0
        %1249 = vmatprep.subr.mxu0 0.0
        %1250 = vmatpush1.msra.mxu0 0.0
        %1251 = vmatprep.subr.mxu0 0.0
        %1252 = vmatpush1.msra.mxu0 0.0
        %1253 = vmatprep.subr.mxu0 0.0
        %1254 = vmatpush1.msra.mxu0 0.0
        %1255 = vmatprep.subr.mxu0 0.0
        %1256 = vmatpush1.msra.mxu0 0.0
        %1257 = vmatprep.subr.mxu0 0.0
        %1258 = vmatpush1.msra.mxu0 0.0
        %1259 = vmatprep.subr.mxu0 0.0
        %1260 = vmatpush1.msra.mxu0 0.0
        %1261 = vmatprep.subr.mxu0 0.0
        %1262 = vmatpush1.msra.mxu0 0.0
        %1263 = vmatprep.subr.mxu0 0.0
        %1264 = vmatpush1.msra.mxu0 0.0
        %1265 = vmatprep.subr.mxu0 0.0
        %1266 = vmatpush1.msra.mxu0 0.0
        %1267 = vmatprep.subr.mxu0 0.0
        %1268 = vmatpush1.msra.mxu0 0.0
        %1269 = vmatprep.subr.mxu0 0.0
        %1270 = vmatpush1.msra.mxu0 0.0
        %1271 = vmatprep.subr.mxu0 0.0
        %1272 = vmatpush1.msra.mxu0 0.0
        %1273 = vmatprep.subr.mxu0 0.0
        %1274 = vmatpush1.msra.mxu0 0.0
        %1275 = vmatprep.subr.mxu0 0.0
        %1276 = vmatpush1.msra.mxu0 0.0
        %1277 = vmatprep.subr.mxu0 0.0
        %1278 = vmatpush1.msra.mxu0 0.0
        %1279 = vmatprep.subr.mxu0 0.0
        %1280 = vmatpush1.msra.mxu0 0.0
        %1281 = vmatprep.subr.mxu0 0.0
        %1282 = vmatpush1.msra.mxu0 0.0
        %1283 = vmatprep.subr.mxu0 0.0
        %1284 = vmatpush1.msra.mxu0 0.0
        %1285 = vmatprep.subr.mxu0 0.0
        %1286 = vmatpush1.msra.mxu0 0.0
        %1287 = vmatprep.subr.mxu0 0.0
        %1288 = vmatpush1.msra.mxu0 0.0
        %1289 = vmatprep.subr.mxu0 0.0
        %1290 = vmatpush1.msra.mxu0 0.0
        %1291 = vmatprep.mubr.f32.mxu0 0.0
        %1292 = vmatmul.mubr.f32.gmra.mrb[0].mxu0 %v1225
        %v1293 = vpop.f32.mrb[0].mxu0
        %v1294 = vadd.f32 %v1223, %v1293
        %v1295 = vpop.f32.mrb[0].mxu0
        %1296 = vdwg.mxu0
        %v1297 = vadd.f32 %v396, %v1294
        %v1298 = vsel %vm427, %v1297, 0.0
        %1299 = vadd.xlane.f32.xlu0 %v1298
        %v1300 = vpop.xlane.xlu0 %1299
        %v1301 = vmul.f32 %v1300, %v431
        %v1302 = vsub.f32 %v1297, %v1301
        %v1303 = vmul.f32 %v1302, %v1302
        %v1304 = vsel %vm427, %v1303, 0.0
        %1305 = vadd.xlane.f32.xlu0 %v1304
        %v1306 = vpop.xlane.xlu0 %1305
        %v1307 = vmul.f32 %v1306, %v431
        %v1308 = vadd.f32 %v1307, 1e-05
        %v1309 = vrsqrt.pop %v1308
        %v1310 = vmul.f32 %v1302, %v1309
        %v1311 = vlaneseq
        %v1312 = vshrl.u32 %v1311, 7
        %v1313 = vsub.s32 2, %v1312
        %v1314 = vrot.slane %v400, %v1313
        %v1315 = vmul.f32 %v1310, %v1314
        %v1316 = vlaneseq
        %v1317 = vshrl.u32 %v1316, 7
        %v1318 = vsub.s32 3, %v1317
        %v1319 = vrot.slane %v400, %v1318
        %v1320 = vadd.f32 %v1315, %v1319
        %v1321 = vlaneseq
        %v1322 = vshrl.u32 %v1321, 7
        %v1323 = vsub.s32 7, %v1322
        %v1324 = vrot.slane %v400, %v1323
        %v1326 = vsel %vm427, %v1320, 0
        %1328 = vmatprep.subr.mxu0 0.0
        %1329 = vmatpush1.msra.mxu0 %v413
        %1330 = vmatprep.subr.mxu0 0.0
        %1331 = vmatpush1.msra.mxu0 %v414
        %1332 = vmatprep.subr.mxu0 0.0
        %1333 = vmatpush1.msra.mxu0 %v415
        %1334 = vmatprep.subr.mxu0 0.0
        %1335 = vmatpush1.msra.mxu0 %v416
        %1336 = vmatprep.subr.mxu0 0.0
        %1337 = vmatpush1.msra.mxu0 0.0
        %1338 = vmatprep.subr.mxu0 0.0
        %1339 = vmatpush1.msra.mxu0 0.0
        %1340 = vmatprep.subr.mxu0 0.0
        %1341 = vmatpush1.msra.mxu0 0.0
        %1342 = vmatprep.subr.mxu0 0.0
        %1343 = vmatpush1.msra.mxu0 0.0
        %1344 = vmatprep.subr.mxu0 0.0
        %1345 = vmatpush1.msra.mxu0 0.0
        %1346 = vmatprep.subr.mxu0 0.0
        %1347 = vmatpush1.msra.mxu0 0.0
        %1348 = vmatprep.subr.mxu0 0.0
        %1349 = vmatpush1.msra.mxu0 0.0
        %1350 = vmatprep.subr.mxu0 0.0
        %1351 = vmatpush1.msra.mxu0 0.0
        %1352 = vmatprep.subr.mxu0 0.0
        %1353 = vmatpush1.msra.mxu0 0.0
        %1354 = vmatprep.subr.mxu0 0.0
        %1355 = vmatpush1.msra.mxu0 0.0
        %1356 = vmatprep.subr.mxu0 0.0
        %1357 = vmatpush1.msra.mxu0 0.0
        %1358 = vmatprep.subr.mxu0 0.0
        %1359 = vmatpush1.msra.mxu0 0.0
        %1360 = vmatprep.subr.mxu0 0.0
        %1361 = vmatpush1.msra.mxu0 0.0
        %1362 = vmatprep.subr.mxu0 0.0
        %1363 = vmatpush1.msra.mxu0 0.0
        %1364 = vmatprep.subr.mxu0 0.0
        %1365 = vmatpush1.msra.mxu0 0.0
        %1366 = vmatprep.subr.mxu0 0.0
        %1367 = vmatpush1.msra.mxu0 0.0
        %1368 = vmatprep.subr.mxu0 0.0
        %1369 = vmatpush1.msra.mxu0 0.0
        %1370 = vmatprep.subr.mxu0 0.0
        %1371 = vmatpush1.msra.mxu0 0.0
        %1372 = vmatprep.subr.mxu0 0.0
        %1373 = vmatpush1.msra.mxu0 0.0
        %1374 = vmatprep.subr.mxu0 0.0
        %1375 = vmatpush1.msra.mxu0 0.0
        %1376 = vmatprep.subr.mxu0 0.0
        %1377 = vmatpush1.msra.mxu0 0.0
        %1378 = vmatprep.subr.mxu0 0.0
        %1379 = vmatpush1.msra.mxu0 0.0
        %1380 = vmatprep.subr.mxu0 0.0
        %1381 = vmatpush1.msra.mxu0 0.0
        %1382 = vmatprep.subr.mxu0 0.0
        %1383 = vmatpush1.msra.mxu0 0.0
        %1384 = vmatprep.subr.mxu0 0.0
        %1385 = vmatpush1.msra.mxu0 0.0
        %1386 = vmatprep.subr.mxu0 0.0
        %1387 = vmatpush1.msra.mxu0 0.0
        %1388 = vmatprep.subr.mxu0 0.0
        %1389 = vmatpush1.msra.mxu0 0.0
        %1390 = vmatprep.subr.mxu0 0.0
        %1391 = vmatpush1.msra.mxu0 0.0
        %1392 = vmatprep.mubr.f32.mxu0 0.0
        %1393 = vmatmul.mubr.f32.gmra.mrb[0].mxu0 %v1326
        %v1394 = vpop.f32.mrb[0].mxu0
        %v1395 = vadd.f32 %v1324, %v1394
        %v1396 = vpop.f32.mrb[0].mxu0
        %1397 = vdwg.mxu0
        %v1398 = vmax.f32 %v1395, 0.0
        %v1399 = vlaneseq
        %v1400 = vshrl.u32 %v1399, 7
        %v1401 = vsub.s32 5, %v1400
        %v1402 = vrot.slane %v400, %v1401
        %vm1403 = vcmask 523264
        %v1405 = vsel %vm1403, %v1398, 0
        %1407 = vmatprep.subr.mxu0 0.0
        %1408 = vmatpush1.msra.mxu0 %v419
        %1409 = vmatprep.subr.mxu0 0.0
        %1410 = vmatpush1.msra.mxu0 %v420
        %1411 = vmatprep.subr.mxu0 0.0
        %1412 = vmatpush1.msra.mxu0 %v421
        %1413 = vmatprep.subr.mxu0 0.0
        %1414 = vmatpush1.msra.mxu0 %v422
        %1415 = vmatprep.subr.mxu0 0.0
        %1416 = vmatpush1.msra.mxu0 %v423
        %1417 = vmatprep.subr.mxu0 0.0
        %1418 = vmatpush1.msra.mxu0 %v424
        %1419 = vmatprep.subr.mxu0 0.0
        %1420 = vmatpush1.msra.mxu0 %v425
        %1421 = vmatprep.subr.mxu0 0.0
        %1422 = vmatpush1.msra.mxu0 %v426
        %1423 = vmatprep.subr.mxu0 0.0
        %1424 = vmatpush1.msra.mxu0 0.0
        %1425 = vmatprep.subr.mxu0 0.0
        %1426 = vmatpush1.msra.mxu0 0.0
        %1427 = vmatprep.subr.mxu0 0.0
        %1428 = vmatpush1.msra.mxu0 0.0
        %1429 = vmatprep.subr.mxu0 0.0
        %1430 = vmatpush1.msra.mxu0 0.0
        %1431 = vmatprep.subr.mxu0 0.0
        %1432 = vmatpush1.msra.mxu0 0.0
        %1433 = vmatprep.subr.mxu0 0.0
        %1434 = vmatpush1.msra.mxu0 0.0
        %1435 = vmatprep.subr.mxu0 0.0
        %1436 = vmatpush1.msra.mxu0 0.0
        %1437 = vmatprep.subr.mxu0 0.0
        %1438 = vmatpush1.msra.mxu0 0.0
        %1439 = vmatprep.subr.mxu0 0.0
        %1440 = vmatpush1.msra.mxu0 0.0
        %1441 = vmatprep.subr.mxu0 0.0
        %1442 = vmatpush1.msra.mxu0 0.0
        %1443 = vmatprep.subr.mxu0 0.0
        %1444 = vmatpush1.msra.mxu0 0.0
        %1445 = vmatprep.subr.mxu0 0.0
        %1446 = vmatpush1.msra.mxu0 0.0
        %1447 = vmatprep.subr.mxu0 0.0
        %1448 = vmatpush1.msra.mxu0 0.0
        %1449 = vmatprep.subr.mxu0 0.0
        %1450 = vmatpush1.msra.mxu0 0.0
        %1451 = vmatprep.subr.mxu0 0.0
        %1452 = vmatpush1.msra.mxu0 0.0
        %1453 = vmatprep.subr.mxu0 0.0
        %1454 = vmatpush1.msra.mxu0 0.0
        %1455 = vmatprep.subr.mxu0 0.0
        %1456 = vmatpush1.msra.mxu0 0.0
        %1457 = vmatprep.subr.mxu0 0.0
        %1458 = vmatpush1.msra.mxu0 0.0
        %1459 = vmatprep.subr.mxu0 0.0
        %1460 = vmatpush1.msra.mxu0 0.0
        %1461 = vmatprep.subr.mxu0 0.0
        %1462 = vmatpush1.msra.mxu0 0.0
        %1463 = vmatprep.subr.mxu0 0.0
        %1464 = vmatpush1.msra.mxu0 0.0
        %1465 = vmatprep.subr.mxu0 0.0
        %1466 = vmatpush1.msra.mxu0 0.0
        %1467 = vmatprep.subr.mxu0 0.0
        %1468 = vmatpush1.msra.mxu0 0.0
        %1469 = vmatprep.subr.mxu0 0.0
        %1470 = vmatpush1.msra.mxu0 0.0
        %1471 = vmatprep.mubr.f32.mxu0 0.0
        %1472 = vmatmul.mubr.f32.gmra.mrb[0].mxu0 %v1405
        %v1473 = vpop.f32.mrb[0].mxu0
        %v1474 = vadd.f32 %v1402, %v1473
        %v1475 = vpop.f32.mrb[0].mxu0
        %1476 = vdwg.mxu0
        %v1477 = vadd.f32 %v1297, %v1474
        %1478 = vst.msk [vmem:[#allocation2] sm:$0xff] %vm427, %v1477
        %p1479 = scmp.eq.s32.totalorder %s32, 1
        // Predicated region
        $region69: #{tpu_custom_call.1} parent=55 // pred_check
          %p1480 = pneg %p1479
        $region70: #{tpu_custom_call.1} parent=55 // pred_check_branch
          %1482 = sbr.rel (%p1480) target = $region72
        $region71: #{tpu_custom_call.1} parent=55 // pred_region
          %v1483 = vld [vmem:[%s8] sm:$0x1]
          %v1484 = vld [vmem:[%s8 + $0x1] sm:$0x1]
          %v1485 = vsel %vm427, %v1477, 0.0
          %1486 = vadd.xlane.f32.xlu0 %v1485
          %v1487 = vpop.xlane.xlu0 %1486
          %v1488 = vmul.f32 %v1487, %v431
          %v1489 = vsub.f32 %v1477, %v1488
          %v1490 = vmul.f32 %v1489, %v1489
          %v1491 = vsel %vm427, %v1490, 0.0
          %1492 = vadd.xlane.f32.xlu0 %v1491
          %v1493 = vpop.xlane.xlu0 %1492
          %v1494 = vmul.f32 %v1493, %v431
          %v1495 = vadd.f32 %v1494, 1e-05
          %v1496 = vrsqrt.pop %v1495
          %v1497 = vmul.f32 %v1489, %v1496
          %v1498 = vlaneseq
          %v1499 = vshrl.u32 %v1498, 7
          %v1500 = vsub.s32 0, %v1499
          %v1501 = vrot.slane %v1483, %v1500
          %v1502 = vmul.f32 %v1497, %v1501
          %v1503 = vlaneseq
          %v1504 = vshrl.u32 %v1503, 7
          %v1505 = vsub.s32 0, %v1504
          %v1506 = vrot.slane %v1484, %v1505
          %v1507 = vadd.f32 %v1502, %v1506
          %1508 = vst.msk [vmem:[%s383] sm:$0xff] %vm427, %v1507
        $region72: #{tpu_custom_call.1} parent=55 // pred_fallthru
          _
        %s1509 = sand.u32 %s246, 1
        %s1510 = scalar_lea.sflag [#allocation5], %s1509
        %s1511 = sand.u32 %s246, 1
        %s1512 = smul.addr %s1511, 8
        %s1513 = scalar_lea.vmem [#allocation8], %s1512
        // Predicated region
        $region73: #{tpu_custom_call.1} parent=55 // pred_check
          %p1514 = pneg %p256
        $region74: #{tpu_custom_call.1} parent=55 // pred_check_branch
          %1516 = sbr.rel (%p1514) target = $region76
        $region75: #{tpu_custom_call.1} parent=55 // pred_region
          %s1518 = ssub.s32 128, 128
          %1519 = vsyncadd %s1510, %s1518
          %s1520 = smul.addr %s31, 128
          %s1521 = scalar_lea.hbm %s9, %s1520
          %s1523 = sshll.u32 %s1513, 4
          %s1524 = int_to_ptr.vmem [resolvable:$true] %s1523
          %1526 = dma.vmem_to_hbm [thread:$0]  %s1524, 128, %s1521, %s1510
        $region76: #{tpu_custom_call.1} parent=55 // pred_fallthru
          _
      $region56: #{tpu_custom_call.1} parent=5 // pred_fallthru
        _
      %p1527 = scmp.le.s32.totalorder 2, %s22
      // Predicated region
      $region77: #{tpu_custom_call.1} parent=5 // pred_check
        %p1528 = pneg %p1527
      $region78: #{tpu_custom_call.1} parent=5 // pred_check_branch
        %1530 = sbr.rel (%p1528) target = $region80
      $region79: #{tpu_custom_call.1} parent=5 // pred_region
        %s1531 = ssub.s32 %s22, 2
        // Predicated region
        $region81: #{tpu_custom_call.1} parent=79 // pred_check
          %p1532 = pneg %p262
        $region82: #{tpu_custom_call.1} parent=79 // pred_check_branch
          %1534 = sbr.rel (%p1532) target = $region84
        $region83: #{tpu_custom_call.1} parent=79 // pred_region
          %s1535 = sand.u32 %s247, 1
          %s1536 = scalar_lea.sflag [#allocation5], %s1535
          %s1537 = sand.u32 %s247, 1
          %s1538 = smul.addr %s1537, 8
          %s1539 = scalar_lea.vmem [#allocation8], %s1538
          %1540 = dma.done %s1536, 128
        $region84: #{tpu_custom_call.1} parent=79 // pred_fallthru
          _
      $region80: #{tpu_custom_call.1} parent=5 // pred_fallthru
        _
    $region6: #{tpu_custom_call.1} parent=1 // loop_footer
      %s26 = sadd.s32 1, %s22
    $region7: #{tpu_custom_call.1} parent=1 // loop_footer_branch
      %21 = sbr.rel target = $region3
    $region8: #{tpu_custom_call.1} parent=1 // loop_exit
      _
    %1541 = vsyncpa [#allocation4], 1
    %s1542 = scalar_lea.sflag [#allocation4], 1
    %1543 = vsyncpa %s1542, 1
    %1544 = vsyncpa [#allocation7], 1
    %1545 = vsyncpa [#allocation5], 1
    %s1546 = scalar_lea.sflag [#allocation5], 1
    %1547 = vsyncpa %s1546, 1

</llo_original>
